<compile_context>
chip_gen: v5e
topology: v5e:2x2
jax: 0.10.0
libtpu: 0.0.40
codegen_flags: <defaults>
</compile_context>

<pallas_src>
from functools import partial

import jax
import jax.numpy as jnp
import numpy as np
from jax.experimental import pallas as pl
from jax.experimental.pallas import tpu as pltpu


def _lstm_kernel(x_ref, wih_ref, whh_ref, b_ref, wfc_ref, bfc_ref,
                 out_ref, xproj_sc):
    T, B_pad, I = x_ref.shape
    H4 = whh_ref.shape[1]
    H = H4 // 4

    # --- Input projection for all timesteps in ONE MXU matmul, with the   ---
    # --- (b_ih + b_hh) bias folded in (broadcast happens exactly once).   ---
    # Reshapes only merge/split leading dims on sublane-tile boundaries
    # (B_pad = 8, 4H multiple of 128) so they are layout no-ops.
    x_all = x_ref[...].reshape(T * B_pad, I)                       # (T*B, I)
    xproj = jnp.dot(x_all, wih_ref[...],
                    preferred_element_type=jnp.float32) + b_ref[...]
    xproj_sc[...] = xproj.reshape(T, B_pad, H4)                    # (T, B, 4H)

    # Single-EUP-op sigmoid: sigmoid(z) == 0.5 * tanh(0.5 * z) + 0.5
    def sigmoid_1eup(z):
        return 0.5 * jnp.tanh(0.5 * z) + 0.5

    # --- Fully unrolled in-kernel recurrence over T timesteps. ---
    def step(t, carry):
        h, c = carry
        # W_hh^T is re-read from VMEM each step on purpose (64 vregs; it
        # cannot stay register-resident, hoisting would only add pressure).
        gates = xproj_sc[t] + jnp.dot(h, whh_ref[...],
                                      preferred_element_type=jnp.float32)
        i_g = sigmoid_1eup(gates[:, 0 * H:1 * H])
        f_g = sigmoid_1eup(gates[:, 1 * H:2 * H])
        g_g = jnp.tanh(gates[:, 2 * H:3 * H])
        o_g = sigmoid_1eup(gates[:, 3 * H:4 * H])
        c_new = f_g * c + i_g * g_g
        h_new = o_g * jnp.tanh(c_new)
        return (h_new, c_new)

    h0 = jnp.zeros((B_pad, H), jnp.float32)
    c0 = jnp.zeros((B_pad, H), jnp.float32)
    h_T, _ = jax.lax.fori_loop(0, T, step, (h0, c0), unroll=True)

    # --- Final FC on the last hidden state; lane-dense (B_pad, 128) store. ---
    out_ref[...] = (
        jnp.dot(h_T, wfc_ref[...], preferred_element_type=jnp.float32)
        + bfc_ref[...]
    ).astype(out_ref.dtype)


@jax.jit
def lstm_net_forward(x, w_ih, w_hh, b_ih, b_hh, w_fc, b_fc):
    """x: (B, T, I) batch_first, like the PyTorch module. Returns (B, O) f32."""
    B, T, I = x.shape
    H = w_hh.shape[1]              # w_hh: (4H, H)
    O = w_fc.shape[0]              # w_fc: (O, H)

    B_pad = ((B + 7) // 8) * 8     # full sublane group -> full (8,128) tiles
    O_pad = ((O + 127) // 128) * 128   # lane-dense epilogue store

    # One pad + one transpose, all inside jit (fused by XLA, no extra dispatch).
    x_tm = jnp.pad(x.astype(jnp.float32), ((0, B_pad - B), (0, 0), (0, 0)))
    x_tm = jnp.transpose(x_tm, (1, 0, 2))                          # (T, B_pad, I)

    wih_t = jnp.transpose(w_ih).astype(jnp.float32)                # (I, 4H)
    whh_t = jnp.transpose(w_hh).astype(jnp.float32)                # (H, 4H)
    bias = (b_ih + b_hh).reshape(1, 4 * H).astype(jnp.float32)     # (1, 4H)
    wfc_t = jnp.pad(jnp.transpose(w_fc).astype(jnp.float32),
                    ((0, 0), (0, O_pad - O)))                      # (H, O_pad)
    bfc = jnp.pad(b_fc.astype(jnp.float32),
                  (0, O_pad - O)).reshape(1, O_pad)                # (1, O_pad)

    grid_spec = pltpu.PrefetchScalarGridSpec(
        num_scalar_prefetch=0,
        grid=(1,),
        in_specs=[
            pl.BlockSpec((T, B_pad, I), lambda i: (0, 0, 0)),      # x time-major
            pl.BlockSpec((I, 4 * H), lambda i: (0, 0)),            # W_ih^T
            pl.BlockSpec((H, 4 * H), lambda i: (0, 0)),            # W_hh^T
            pl.BlockSpec((1, 4 * H), lambda i: (0, 0)),            # b_ih + b_hh
            pl.BlockSpec((H, O_pad), lambda i: (0, 0)),            # W_fc^T (padded)
            pl.BlockSpec((1, O_pad), lambda i: (0, 0)),            # b_fc   (padded)
        ],
        out_specs=pl.BlockSpec((B_pad, O_pad), lambda i: (0, 0)),
        scratch_shapes=[
            pltpu.VMEM((T, B_pad, 4 * H), jnp.float32),            # x_proj, all t
        ],
    )

    out_padded = pl.pallas_call(
        _lstm_kernel,
        out_shape=jax.ShapeDtypeStruct((B_pad, O_pad), jnp.float32),
        grid_spec=grid_spec,
        compiler_params=pltpu.CompilerParams(
            dimension_semantics=("arbitrary",)),
    )(x_tm, wih_t, whh_t, bias, wfc_t, bfc)

    return out_padded[:B, :O]


def lstm_net_reference(x, w_ih, w_hh, b_ih, b_hh, w_fc, b_fc):
    """Plain-JAX reference matching torch.nn.LSTM + Linear semantics."""
    B, T, I = x.shape
    H = w_hh.shape[1]

    def step(carry, x_t):
        h, c = carry
        gates = x_t @ w_ih.T + h @ w_hh.T + b_ih + b_hh
        i = jax.nn.sigmoid(gates[:, 0 * H:1 * H])
        f = jax.nn.sigmoid(gates[:, 1 * H:2 * H])
        g = jnp.tanh(gates[:, 2 * H:3 * H])
        o = jax.nn.sigmoid(gates[:, 3 * H:4 * H])
        c = f * c + i * g
        h = o * jnp.tanh(c)
        return (h, c), None

    h0 = jnp.zeros((B, H), jnp.float32)
    c0 = jnp.zeros((B, H), jnp.float32)
    (h_T, _), _ = jax.lax.scan(step, (h0, c0), jnp.transpose(x, (1, 0, 2)))
    return h_T @ w_fc.T + b_fc


if __name__ == "__main__":
    # Module hyperparameters from simpleLSTM.py
    input_size, hidden_size, output_size = 28, 128, 10
    B, T = 4, 8

    key = jax.random.PRNGKey(0)
    ks = jax.random.split(key, 7)
    k_scale = 1.0 / np.sqrt(hidden_size)   # PyTorch default uniform init bound

    x = jax.random.normal(ks[0], (B, T, input_size), dtype=jnp.float32)
    w_ih = jax.random.uniform(ks[1], (4 * hidden_size, input_size),
                              minval=-k_scale, maxval=k_scale, dtype=jnp.float32)
    w_hh = jax.random.uniform(ks[2], (4 * hidden_size, hidden_size),
                              minval=-k_scale, maxval=k_scale, dtype=jnp.float32)
    b_ih = jax.random.uniform(ks[3], (4 * hidden_size,),
                              minval=-k_scale, maxval=k_scale, dtype=jnp.float32)
    b_hh = jax.random.uniform(ks[4], (4 * hidden_size,),
                              minval=-k_scale, maxval=k_scale, dtype=jnp.float32)
    w_fc = jax.random.uniform(ks[5], (output_size, hidden_size),
                              minval=-k_scale, maxval=k_scale, dtype=jnp.float32)
    b_fc = jax.random.uniform(ks[6], (output_size,),
                              minval=-k_scale, maxval=k_scale, dtype=jnp.float32)

    out = lstm_net_forward(x, w_ih, w_hh, b_ih, b_hh, w_fc, b_fc)
    out = jax.block_until_ready(out)

    ref = lstm_net_reference(x, w_ih, w_hh, b_ih, b_hh, w_fc, b_fc)
    assert out.shape == (B, output_size)
    np.testing.assert_allclose(np.asarray(out), np.asarray(ref),
                               rtol=1e-4, atol=1e-4)

    print("KERNEL_OK")
</pallas_src>

<mosaic_0001>
module attributes {stable_mosaic.version = 11 : i64} {
  func.func @_lstm_kernel(%arg0: i32, %arg1: memref<8x8x28xf32, #tpu.memory_space<vmem>>, %arg2: memref<28x512xf32, #tpu.memory_space<vmem>>, %arg3: memref<128x512xf32, #tpu.memory_space<vmem>>, %arg4: memref<1x512xf32, #tpu.memory_space<vmem>>, %arg5: memref<128x128xf32, #tpu.memory_space<vmem>>, %arg6: memref<1x128xf32, #tpu.memory_space<vmem>>, %arg7: memref<8x128xf32, #tpu.memory_space<vmem>>, %arg8: memref<8x8x512xf32, #tpu.memory_space<vmem>>) attributes {dimension_semantics = [#tpu.dimension_semantics<arbitrary>], iteration_bounds = array<i64: 1>, scalar_prefetch = 0 : i64, scratch_operands = 1 : i64, tpu.core_type = #tpu.core_type<tc>, window_params = [{pipeline_mode = #tpu.pipeline_mode<synchronous>, transform_indices = @transform_0, window_bounds = array<i64: 8, 8, 28>}, {pipeline_mode = #tpu.pipeline_mode<synchronous>, transform_indices = @transform_1, window_bounds = array<i64: 28, 512>}, {pipeline_mode = #tpu.pipeline_mode<synchronous>, transform_indices = @transform_2, window_bounds = array<i64: 128, 512>}, {pipeline_mode = #tpu.pipeline_mode<synchronous>, transform_indices = @transform_3, window_bounds = array<i64: 1, 512>}, {pipeline_mode = #tpu.pipeline_mode<synchronous>, transform_indices = @transform_4, window_bounds = array<i64: 128, 128>}, {pipeline_mode = #tpu.pipeline_mode<synchronous>, transform_indices = @transform_5, window_bounds = array<i64: 1, 128>}, {pipeline_mode = #tpu.pipeline_mode<synchronous>, transform_indices = @transform_6, window_bounds = array<i64: 8, 128>}]} {
    %c0 = arith.constant 0 : index
    %c0_0 = arith.constant 0 : index
    %c0_1 = arith.constant 0 : index
    %0 = vector.load %arg1[%c0, %c0_0, %c0_1] : memref<8x8x28xf32, #tpu.memory_space<vmem>>, vector<8x8x28xf32>
    %1 = vector.shape_cast %0 : vector<8x8x28xf32> to vector<64x28xf32>
    %c0_2 = arith.constant 0 : index
    %c0_3 = arith.constant 0 : index
    %2 = vector.load %arg2[%c0_2, %c0_3] : memref<28x512xf32, #tpu.memory_space<vmem>>, vector<28x512xf32>
    %cst = arith.constant dense<0.000000e+00> : vector<64x512xf32>
    %3 = tpu.matmul %1, %2, %cst {dimension_numbers = #tpu.dot_dimension_numbers<[1], [0], [0], [1], [0, 0, 1, 1], [], []>} : vector<64x28xf32>, vector<28x512xf32>, vector<64x512xf32> -> vector<64x512xf32>
    %c0_4 = arith.constant 0 : index
    %c0_5 = arith.constant 0 : index
    %4 = vector.load %arg4[%c0_4, %c0_5] : memref<1x512xf32, #tpu.memory_space<vmem>>, vector<1x512xf32>
    %5 = vector.broadcast %4 : vector<1x512xf32> to vector<64x512xf32>
    %6 = arith.addf %3, %5 : vector<64x512xf32>
    %7 = vector.shape_cast %6 : vector<64x512xf32> to vector<8x8x512xf32>
    %c0_6 = arith.constant 0 : index
    %c0_7 = arith.constant 0 : index
    %c0_8 = arith.constant 0 : index
    %8 = vector.load %arg8[%c0_6, %c0_7, %c0_8] : memref<8x8x512xf32, #tpu.memory_space<vmem>>, vector<8x8x512xf32>
    tpu.vector_store %arg8[%c0_6, %c0_7, %c0_8], %7 {strides = array<i32>} : memref<8x8x512xf32, #tpu.memory_space<vmem>>, vector<8x8x512xf32>,
    %cst_9 = arith.constant 0.000000e+00 : f32
    %9 = vector.broadcast %cst_9 : f32 to vector<8x128xf32>
    %cst_10 = arith.constant 0.000000e+00 : f32
    %10 = vector.broadcast %cst_10 : f32 to vector<8x128xf32>
    %c0_i32 = arith.constant 0 : i32
    %11 = arith.index_cast %c0_i32 : i32 to index
    %c0_11 = arith.constant 0 : index
    %c0_12 = arith.constant 0 : index
    %12 = vector.load %arg8[%11, %c0_11, %c0_12] : memref<8x8x512xf32, #tpu.memory_space<vmem>>, vector<1x8x512xf32>
    %13 = vector.shape_cast %12 : vector<1x8x512xf32> to vector<8x512xf32>
    %c0_13 = arith.constant 0 : index
    %c0_14 = arith.constant 0 : index
    %14 = vector.load %arg3[%c0_13, %c0_14] : memref<128x512xf32, #tpu.memory_space<vmem>>, vector<128x512xf32>
    %cst_15 = arith.constant dense<0.000000e+00> : vector<8x512xf32>
    %15 = tpu.matmul %9, %14, %cst_15 {dimension_numbers = #tpu.dot_dimension_numbers<[1], [0], [0], [1], [0, 0, 1, 1], [], []>} : vector<8x128xf32>, vector<128x512xf32>, vector<8x512xf32> -> vector<8x512xf32>
    %16 = arith.addf %13, %15 : vector<8x512xf32>
    %17 = vector.extract_strided_slice %16 {offsets = [0, 0], sizes = [8, 128], strides = [1, 1]} : vector<8x512xf32> to vector<8x128xf32>
    %cst_16 = arith.constant 5.000000e-01 : f32
    %18 = vector.broadcast %cst_16 : f32 to vector<8x128xf32>
    %19 = arith.mulf %18, %17 : vector<8x128xf32>
    %20 = math.tanh %19 : vector<8x128xf32>
    %cst_17 = arith.constant 5.000000e-01 : f32
    %21 = vector.broadcast %cst_17 : f32 to vector<8x128xf32>
    %22 = arith.mulf %21, %20 : vector<8x128xf32>
    %cst_18 = arith.constant 5.000000e-01 : f32
    %23 = vector.broadcast %cst_18 : f32 to vector<8x128xf32>
    %24 = arith.addf %22, %23 : vector<8x128xf32>
    %25 = vector.extract_strided_slice %16 {offsets = [0, 128], sizes = [8, 128], strides = [1, 1]} : vector<8x512xf32> to vector<8x128xf32>
    %cst_19 = arith.constant 5.000000e-01 : f32
    %26 = vector.broadcast %cst_19 : f32 to vector<8x128xf32>
    %27 = arith.mulf %26, %25 : vector<8x128xf32>
    %28 = math.tanh %27 : vector<8x128xf32>
    %cst_20 = arith.constant 5.000000e-01 : f32
    %29 = vector.broadcast %cst_20 : f32 to vector<8x128xf32>
    %30 = arith.mulf %29, %28 : vector<8x128xf32>
    %cst_21 = arith.constant 5.000000e-01 : f32
    %31 = vector.broadcast %cst_21 : f32 to vector<8x128xf32>
    %32 = arith.addf %30, %31 : vector<8x128xf32>
    %33 = vector.extract_strided_slice %16 {offsets = [0, 256], sizes = [8, 128], strides = [1, 1]} : vector<8x512xf32> to vector<8x128xf32>
    %34 = math.tanh %33 : vector<8x128xf32>
    %35 = vector.extract_strided_slice %16 {offsets = [0, 384], sizes = [8, 128], strides = [1, 1]} : vector<8x512xf32> to vector<8x128xf32>
    %cst_22 = arith.constant 5.000000e-01 : f32
    %36 = vector.broadcast %cst_22 : f32 to vector<8x128xf32>
    %37 = arith.mulf %36, %35 : vector<8x128xf32>
    %38 = math.tanh %37 : vector<8x128xf32>
    %cst_23 = arith.constant 5.000000e-01 : f32
    %39 = vector.broadcast %cst_23 : f32 to vector<8x128xf32>
    %40 = arith.mulf %39, %38 : vector<8x128xf32>
    %cst_24 = arith.constant 5.000000e-01 : f32
    %41 = vector.broadcast %cst_24 : f32 to vector<8x128xf32>
    %42 = arith.addf %40, %41 : vector<8x128xf32>
    %43 = arith.mulf %32, %10 : vector<8x128xf32>
    %44 = arith.mulf %24, %34 : vector<8x128xf32>
    %45 = arith.addf %43, %44 : vector<8x128xf32>
    %46 = math.tanh %45 : vector<8x128xf32>
    %47 = arith.mulf %42, %46 : vector<8x128xf32>
    %c1_i32 = arith.constant 1 : i32
    %48 = arith.index_cast %c1_i32 : i32 to index
    %c0_25 = arith.constant 0 : index
    %c0_26 = arith.constant 0 : index
    %49 = vector.load %arg8[%48, %c0_25, %c0_26] : memref<8x8x512xf32, #tpu.memory_space<vmem>>, vector<1x8x512xf32>
    %50 = vector.shape_cast %49 : vector<1x8x512xf32> to vector<8x512xf32>
    %c0_27 = arith.constant 0 : index
    %c0_28 = arith.constant 0 : index
    %51 = vector.load %arg3[%c0_27, %c0_28] : memref<128x512xf32, #tpu.memory_space<vmem>>, vector<128x512xf32>
    %cst_29 = arith.constant dense<0.000000e+00> : vector<8x512xf32>
    %52 = tpu.matmul %47, %51, %cst_29 {dimension_numbers = #tpu.dot_dimension_numbers<[1], [0], [0], [1], [0, 0, 1, 1], [], []>} : vector<8x128xf32>, vector<128x512xf32>, vector<8x512xf32> -> vector<8x512xf32>
    %53 = arith.addf %50, %52 : vector<8x512xf32>
    %54 = vector.extract_strided_slice %53 {offsets = [0, 0], sizes = [8, 128], strides = [1, 1]} : vector<8x512xf32> to vector<8x128xf32>
    %cst_30 = arith.constant 5.000000e-01 : f32
    %55 = vector.broadcast %cst_30 : f32 to vector<8x128xf32>
    %56 = arith.mulf %55, %54 : vector<8x128xf32>
    %57 = math.tanh %56 : vector<8x128xf32>
    %cst_31 = arith.constant 5.000000e-01 : f32
    %58 = vector.broadcast %cst_31 : f32 to vector<8x128xf32>
    %59 = arith.mulf %58, %57 : vector<8x128xf32>
    %cst_32 = arith.constant 5.000000e-01 : f32
    %60 = vector.broadcast %cst_32 : f32 to vector<8x128xf32>
    %61 = arith.addf %59, %60 : vector<8x128xf32>
    %62 = vector.extract_strided_slice %53 {offsets = [0, 128], sizes = [8, 128], strides = [1, 1]} : vector<8x512xf32> to vector<8x128xf32>
    %cst_33 = arith.constant 5.000000e-01 : f32
    %63 = vector.broadcast %cst_33 : f32 to vector<8x128xf32>
    %64 = arith.mulf %63, %62 : vector<8x128xf32>
    %65 = math.tanh %64 : vector<8x128xf32>
    %cst_34 = arith.constant 5.000000e-01 : f32
    %66 = vector.broadcast %cst_34 : f32 to vector<8x128xf32>
    %67 = arith.mulf %66, %65 : vector<8x128xf32>
    %cst_35 = arith.constant 5.000000e-01 : f32
    %68 = vector.broadcast %cst_35 : f32 to vector<8x128xf32>
    %69 = arith.addf %67, %68 : vector<8x128xf32>
    %70 = vector.extract_strided_slice %53 {offsets = [0, 256], sizes = [8, 128], strides = [1, 1]} : vector<8x512xf32> to vector<8x128xf32>
    %71 = math.tanh %70 : vector<8x128xf32>
    %72 = vector.extract_strided_slice %53 {offsets = [0, 384], sizes = [8, 128], strides = [1, 1]} : vector<8x512xf32> to vector<8x128xf32>
    %cst_36 = arith.constant 5.000000e-01 : f32
    %73 = vector.broadcast %cst_36 : f32 to vector<8x128xf32>
    %74 = arith.mulf %73, %72 : vector<8x128xf32>
    %75 = math.tanh %74 : vector<8x128xf32>
    %cst_37 = arith.constant 5.000000e-01 : f32
    %76 = vector.broadcast %cst_37 : f32 to vector<8x128xf32>
    %77 = arith.mulf %76, %75 : vector<8x128xf32>
    %cst_38 = arith.constant 5.000000e-01 : f32
    %78 = vector.broadcast %cst_38 : f32 to vector<8x128xf32>
    %79 = arith.addf %77, %78 : vector<8x128xf32>
    %80 = arith.mulf %69, %45 : vector<8x128xf32>
    %81 = arith.mulf %61, %71 : vector<8x128xf32>
    %82 = arith.addf %80, %81 : vector<8x128xf32>
    %83 = math.tanh %82 : vector<8x128xf32>
    %84 = arith.mulf %79, %83 : vector<8x128xf32>
    %c2_i32 = arith.constant 2 : i32
    %85 = arith.index_cast %c2_i32 : i32 to index
    %c0_39 = arith.constant 0 : index
    %c0_40 = arith.constant 0 : index
    %86 = vector.load %arg8[%85, %c0_39, %c0_40] : memref<8x8x512xf32, #tpu.memory_space<vmem>>, vector<1x8x512xf32>
    %87 = vector.shape_cast %86 : vector<1x8x512xf32> to vector<8x512xf32>
    %c0_41 = arith.constant 0 : index
    %c0_42 = arith.constant 0 : index
    %88 = vector.load %arg3[%c0_41, %c0_42] : memref<128x512xf32, #tpu.memory_space<vmem>>, vector<128x512xf32>
    %cst_43 = arith.constant dense<0.000000e+00> : vector<8x512xf32>
    %89 = tpu.matmul %84, %88, %cst_43 {dimension_numbers = #tpu.dot_dimension_numbers<[1], [0], [0], [1], [0, 0, 1, 1], [], []>} : vector<8x128xf32>, vector<128x512xf32>, vector<8x512xf32> -> vector<8x512xf32>
    %90 = arith.addf %87, %89 : vector<8x512xf32>
    %91 = vector.extract_strided_slice %90 {offsets = [0, 0], sizes = [8, 128], strides = [1, 1]} : vector<8x512xf32> to vector<8x128xf32>
    %cst_44 = arith.constant 5.000000e-01 : f32
    %92 = vector.broadcast %cst_44 : f32 to vector<8x128xf32>
    %93 = arith.mulf %92, %91 : vector<8x128xf32>
    %94 = math.tanh %93 : vector<8x128xf32>
    %cst_45 = arith.constant 5.000000e-01 : f32
    %95 = vector.broadcast %cst_45 : f32 to vector<8x128xf32>
    %96 = arith.mulf %95, %94 : vector<8x128xf32>
    %cst_46 = arith.constant 5.000000e-01 : f32
    %97 = vector.broadcast %cst_46 : f32 to vector<8x128xf32>
    %98 = arith.addf %96, %97 : vector<8x128xf32>
    %99 = vector.extract_strided_slice %90 {offsets = [0, 128], sizes = [8, 128], strides = [1, 1]} : vector<8x512xf32> to vector<8x128xf32>
    %cst_47 = arith.constant 5.000000e-01 : f32
    %100 = vector.broadcast %cst_47 : f32 to vector<8x128xf32>
    %101 = arith.mulf %100, %99 : vector<8x128xf32>
    %102 = math.tanh %101 : vector<8x128xf32>
    %cst_48 = arith.constant 5.000000e-01 : f32
    %103 = vector.broadcast %cst_48 : f32 to vector<8x128xf32>
    %104 = arith.mulf %103, %102 : vector<8x128xf32>
    %cst_49 = arith.constant 5.000000e-01 : f32
    %105 = vector.broadcast %cst_49 : f32 to vector<8x128xf32>
    %106 = arith.addf %104, %105 : vector<8x128xf32>
    %107 = vector.extract_strided_slice %90 {offsets = [0, 256], sizes = [8, 128], strides = [1, 1]} : vector<8x512xf32> to vector<8x128xf32>
    %108 = math.tanh %107 : vector<8x128xf32>
    %109 = vector.extract_strided_slice %90 {offsets = [0, 384], sizes = [8, 128], strides = [1, 1]} : vector<8x512xf32> to vector<8x128xf32>
    %cst_50 = arith.constant 5.000000e-01 : f32
    %110 = vector.broadcast %cst_50 : f32 to vector<8x128xf32>
    %111 = arith.mulf %110, %109 : vector<8x128xf32>
    %112 = math.tanh %111 : vector<8x128xf32>
    %cst_51 = arith.constant 5.000000e-01 : f32
    %113 = vector.broadcast %cst_51 : f32 to vector<8x128xf32>
    %114 = arith.mulf %113, %112 : vector<8x128xf32>
    %cst_52 = arith.constant 5.000000e-01 : f32
    %115 = vector.broadcast %cst_52 : f32 to vector<8x128xf32>
    %116 = arith.addf %114, %115 : vector<8x128xf32>
    %117 = arith.mulf %106, %82 : vector<8x128xf32>
    %118 = arith.mulf %98, %108 : vector<8x128xf32>
    %119 = arith.addf %117, %118 : vector<8x128xf32>
    %120 = math.tanh %119 : vector<8x128xf32>
    %121 = arith.mulf %116, %120 : vector<8x128xf32>
    %c3_i32 = arith.constant 3 : i32
    %122 = arith.index_cast %c3_i32 : i32 to index
    %c0_53 = arith.constant 0 : index
    %c0_54 = arith.constant 0 : index
    %123 = vector.load %arg8[%122, %c0_53, %c0_54] : memref<8x8x512xf32, #tpu.memory_space<vmem>>, vector<1x8x512xf32>
    %124 = vector.shape_cast %123 : vector<1x8x512xf32> to vector<8x512xf32>
    %c0_55 = arith.constant 0 : index
    %c0_56 = arith.constant 0 : index
    %125 = vector.load %arg3[%c0_55, %c0_56] : memref<128x512xf32, #tpu.memory_space<vmem>>, vector<128x512xf32>
    %cst_57 = arith.constant dense<0.000000e+00> : vector<8x512xf32>
    %126 = tpu.matmul %121, %125, %cst_57 {dimension_numbers = #tpu.dot_dimension_numbers<[1], [0], [0], [1], [0, 0, 1, 1], [], []>} : vector<8x128xf32>, vector<128x512xf32>, vector<8x512xf32> -> vector<8x512xf32>
    %127 = arith.addf %124, %126 : vector<8x512xf32>
    %128 = vector.extract_strided_slice %127 {offsets = [0, 0], sizes = [8, 128], strides = [1, 1]} : vector<8x512xf32> to vector<8x128xf32>
    %cst_58 = arith.constant 5.000000e-01 : f32
    %129 = vector.broadcast %cst_58 : f32 to vector<8x128xf32>
    %130 = arith.mulf %129, %128 : vector<8x128xf32>
    %131 = math.tanh %130 : vector<8x128xf32>
    %cst_59 = arith.constant 5.000000e-01 : f32
    %132 = vector.broadcast %cst_59 : f32 to vector<8x128xf32>
    %133 = arith.mulf %132, %131 : vector<8x128xf32>
    %cst_60 = arith.constant 5.000000e-01 : f32
    %134 = vector.broadcast %cst_60 : f32 to vector<8x128xf32>
    %135 = arith.addf %133, %134 : vector<8x128xf32>
    %136 = vector.extract_strided_slice %127 {offsets = [0, 128], sizes = [8, 128], strides = [1, 1]} : vector<8x512xf32> to vector<8x128xf32>
    %cst_61 = arith.constant 5.000000e-01 : f32
    %137 = vector.broadcast %cst_61 : f32 to vector<8x128xf32>
    %138 = arith.mulf %137, %136 : vector<8x128xf32>
    %139 = math.tanh %138 : vector<8x128xf32>
    %cst_62 = arith.constant 5.000000e-01 : f32
    %140 = vector.broadcast %cst_62 : f32 to vector<8x128xf32>
    %141 = arith.mulf %140, %139 : vector<8x128xf32>
    %cst_63 = arith.constant 5.000000e-01 : f32
    %142 = vector.broadcast %cst_63 : f32 to vector<8x128xf32>
    %143 = arith.addf %141, %142 : vector<8x128xf32>
    %144 = vector.extract_strided_slice %127 {offsets = [0, 256], sizes = [8, 128], strides = [1, 1]} : vector<8x512xf32> to vector<8x128xf32>
    %145 = math.tanh %144 : vector<8x128xf32>
    %146 = vector.extract_strided_slice %127 {offsets = [0, 384], sizes = [8, 128], strides = [1, 1]} : vector<8x512xf32> to vector<8x128xf32>
    %cst_64 = arith.constant 5.000000e-01 : f32
    %147 = vector.broadcast %cst_64 : f32 to vector<8x128xf32>
    %148 = arith.mulf %147, %146 : vector<8x128xf32>
    %149 = math.tanh %148 : vector<8x128xf32>
    %cst_65 = arith.constant 5.000000e-01 : f32
    %150 = vector.broadcast %cst_65 : f32 to vector<8x128xf32>
    %151 = arith.mulf %150, %149 : vector<8x128xf32>
    %cst_66 = arith.constant 5.000000e-01 : f32
    %152 = vector.broadcast %cst_66 : f32 to vector<8x128xf32>
    %153 = arith.addf %151, %152 : vector<8x128xf32>
    %154 = arith.mulf %143, %119 : vector<8x128xf32>
    %155 = arith.mulf %135, %145 : vector<8x128xf32>
    %156 = arith.addf %154, %155 : vector<8x128xf32>
    %157 = math.tanh %156 : vector<8x128xf32>
    %158 = arith.mulf %153, %157 : vector<8x128xf32>
    %c4_i32 = arith.constant 4 : i32
    %159 = arith.index_cast %c4_i32 : i32 to index
    %c0_67 = arith.constant 0 : index
    %c0_68 = arith.constant 0 : index
    %160 = vector.load %arg8[%159, %c0_67, %c0_68] : memref<8x8x512xf32, #tpu.memory_space<vmem>>, vector<1x8x512xf32>
    %161 = vector.shape_cast %160 : vector<1x8x512xf32> to vector<8x512xf32>
    %c0_69 = arith.constant 0 : index
    %c0_70 = arith.constant 0 : index
    %162 = vector.load %arg3[%c0_69, %c0_70] : memref<128x512xf32, #tpu.memory_space<vmem>>, vector<128x512xf32>
    %cst_71 = arith.constant dense<0.000000e+00> : vector<8x512xf32>
    %163 = tpu.matmul %158, %162, %cst_71 {dimension_numbers = #tpu.dot_dimension_numbers<[1], [0], [0], [1], [0, 0, 1, 1], [], []>} : vector<8x128xf32>, vector<128x512xf32>, vector<8x512xf32> -> vector<8x512xf32>
    %164 = arith.addf %161, %163 : vector<8x512xf32>
    %165 = vector.extract_strided_slice %164 {offsets = [0, 0], sizes = [8, 128], strides = [1, 1]} : vector<8x512xf32> to vector<8x128xf32>
    %cst_72 = arith.constant 5.000000e-01 : f32
    %166 = vector.broadcast %cst_72 : f32 to vector<8x128xf32>
    %167 = arith.mulf %166, %165 : vector<8x128xf32>
    %168 = math.tanh %167 : vector<8x128xf32>
    %cst_73 = arith.constant 5.000000e-01 : f32
    %169 = vector.broadcast %cst_73 : f32 to vector<8x128xf32>
    %170 = arith.mulf %169, %168 : vector<8x128xf32>
    %cst_74 = arith.constant 5.000000e-01 : f32
    %171 = vector.broadcast %cst_74 : f32 to vector<8x128xf32>
    %172 = arith.addf %170, %171 : vector<8x128xf32>
    %173 = vector.extract_strided_slice %164 {offsets = [0, 128], sizes = [8, 128], strides = [1, 1]} : vector<8x512xf32> to vector<8x128xf32>
    %cst_75 = arith.constant 5.000000e-01 : f32
    %174 = vector.broadcast %cst_75 : f32 to vector<8x128xf32>
    %175 = arith.mulf %174, %173 : vector<8x128xf32>
    %176 = math.tanh %175 : vector<8x128xf32>
    %cst_76 = arith.constant 5.000000e-01 : f32
    %177 = vector.broadcast %cst_76 : f32 to vector<8x128xf32>
    %178 = arith.mulf %177, %176 : vector<8x128xf32>
    %cst_77 = arith.constant 5.000000e-01 : f32
    %179 = vector.broadcast %cst_77 : f32 to vector<8x128xf32>
    %180 = arith.addf %178, %179 : vector<8x128xf32>
    %181 = vector.extract_strided_slice %164 {offsets = [0, 256], sizes = [8, 128], strides = [1, 1]} : vector<8x512xf32> to vector<8x128xf32>
    %182 = math.tanh %181 : vector<8x128xf32>
    %183 = vector.extract_strided_slice %164 {offsets = [0, 384], sizes = [8, 128], strides = [1, 1]} : vector<8x512xf32> to vector<8x128xf32>
    %cst_78 = arith.constant 5.000000e-01 : f32
    %184 = vector.broadcast %cst_78 : f32 to vector<8x128xf32>
    %185 = arith.mulf %184, %183 : vector<8x128xf32>
    %186 = math.tanh %185 : vector<8x128xf32>
    %cst_79 = arith.constant 5.000000e-01 : f32
    %187 = vector.broadcast %cst_79 : f32 to vector<8x128xf32>
    %188 = arith.mulf %187, %186 : vector<8x128xf32>
    %cst_80 = arith.constant 5.000000e-01 : f32
    %189 = vector.broadcast %cst_80 : f32 to vector<8x128xf32>
    %190 = arith.addf %188, %189 : vector<8x128xf32>
    %191 = arith.mulf %180, %156 : vector<8x128xf32>
    %192 = arith.mulf %172, %182 : vector<8x128xf32>
    %193 = arith.addf %191, %192 : vector<8x128xf32>
    %194 = math.tanh %193 : vector<8x128xf32>
    %195 = arith.mulf %190, %194 : vector<8x128xf32>
    %c5_i32 = arith.constant 5 : i32
    %196 = arith.index_cast %c5_i32 : i32 to index
    %c0_81 = arith.constant 0 : index
    %c0_82 = arith.constant 0 : index
    %197 = vector.load %arg8[%196, %c0_81, %c0_82] : memref<8x8x512xf32, #tpu.memory_space<vmem>>, vector<1x8x512xf32>
    %198 = vector.shape_cast %197 : vector<1x8x512xf32> to vector<8x512xf32>
    %c0_83 = arith.constant 0 : index
    %c0_84 = arith.constant 0 : index
    %199 = vector.load %arg3[%c0_83, %c0_84] : memref<128x512xf32, #tpu.memory_space<vmem>>, vector<128x512xf32>
    %cst_85 = arith.constant dense<0.000000e+00> : vector<8x512xf32>
    %200 = tpu.matmul %195, %199, %cst_85 {dimension_numbers = #tpu.dot_dimension_numbers<[1], [0], [0], [1], [0, 0, 1, 1], [], []>} : vector<8x128xf32>, vector<128x512xf32>, vector<8x512xf32> -> vector<8x512xf32>
    %201 = arith.addf %198, %200 : vector<8x512xf32>
    %202 = vector.extract_strided_slice %201 {offsets = [0, 0], sizes = [8, 128], strides = [1, 1]} : vector<8x512xf32> to vector<8x128xf32>
    %cst_86 = arith.constant 5.000000e-01 : f32
    %203 = vector.broadcast %cst_86 : f32 to vector<8x128xf32>
    %204 = arith.mulf %203, %202 : vector<8x128xf32>
    %205 = math.tanh %204 : vector<8x128xf32>
    %cst_87 = arith.constant 5.000000e-01 : f32
    %206 = vector.broadcast %cst_87 : f32 to vector<8x128xf32>
    %207 = arith.mulf %206, %205 : vector<8x128xf32>
    %cst_88 = arith.constant 5.000000e-01 : f32
    %208 = vector.broadcast %cst_88 : f32 to vector<8x128xf32>
    %209 = arith.addf %207, %208 : vector<8x128xf32>
    %210 = vector.extract_strided_slice %201 {offsets = [0, 128], sizes = [8, 128], strides = [1, 1]} : vector<8x512xf32> to vector<8x128xf32>
    %cst_89 = arith.constant 5.000000e-01 : f32
    %211 = vector.broadcast %cst_89 : f32 to vector<8x128xf32>
    %212 = arith.mulf %211, %210 : vector<8x128xf32>
    %213 = math.tanh %212 : vector<8x128xf32>
    %cst_90 = arith.constant 5.000000e-01 : f32
    %214 = vector.broadcast %cst_90 : f32 to vector<8x128xf32>
    %215 = arith.mulf %214, %213 : vector<8x128xf32>
    %cst_91 = arith.constant 5.000000e-01 : f32
    %216 = vector.broadcast %cst_91 : f32 to vector<8x128xf32>
    %217 = arith.addf %215, %216 : vector<8x128xf32>
    %218 = vector.extract_strided_slice %201 {offsets = [0, 256], sizes = [8, 128], strides = [1, 1]} : vector<8x512xf32> to vector<8x128xf32>
    %219 = math.tanh %218 : vector<8x128xf32>
    %220 = vector.extract_strided_slice %201 {offsets = [0, 384], sizes = [8, 128], strides = [1, 1]} : vector<8x512xf32> to vector<8x128xf32>
    %cst_92 = arith.constant 5.000000e-01 : f32
    %221 = vector.broadcast %cst_92 : f32 to vector<8x128xf32>
    %222 = arith.mulf %221, %220 : vector<8x128xf32>
    %223 = math.tanh %222 : vector<8x128xf32>
    %cst_93 = arith.constant 5.000000e-01 : f32
    %224 = vector.broadcast %cst_93 : f32 to vector<8x128xf32>
    %225 = arith.mulf %224, %223 : vector<8x128xf32>
    %cst_94 = arith.constant 5.000000e-01 : f32
    %226 = vector.broadcast %cst_94 : f32 to vector<8x128xf32>
    %227 = arith.addf %225, %226 : vector<8x128xf32>
    %228 = arith.mulf %217, %193 : vector<8x128xf32>
    %229 = arith.mulf %209, %219 : vector<8x128xf32>
    %230 = arith.addf %228, %229 : vector<8x128xf32>
    %231 = math.tanh %230 : vector<8x128xf32>
    %232 = arith.mulf %227, %231 : vector<8x128xf32>
    %c6_i32 = arith.constant 6 : i32
    %233 = arith.index_cast %c6_i32 : i32 to index
    %c0_95 = arith.constant 0 : index
    %c0_96 = arith.constant 0 : index
    %234 = vector.load %arg8[%233, %c0_95, %c0_96] : memref<8x8x512xf32, #tpu.memory_space<vmem>>, vector<1x8x512xf32>
    %235 = vector.shape_cast %234 : vector<1x8x512xf32> to vector<8x512xf32>
    %c0_97 = arith.constant 0 : index
    %c0_98 = arith.constant 0 : index
    %236 = vector.load %arg3[%c0_97, %c0_98] : memref<128x512xf32, #tpu.memory_space<vmem>>, vector<128x512xf32>
    %cst_99 = arith.constant dense<0.000000e+00> : vector<8x512xf32>
    %237 = tpu.matmul %232, %236, %cst_99 {dimension_numbers = #tpu.dot_dimension_numbers<[1], [0], [0], [1], [0, 0, 1, 1], [], []>} : vector<8x128xf32>, vector<128x512xf32>, vector<8x512xf32> -> vector<8x512xf32>
    %238 = arith.addf %235, %237 : vector<8x512xf32>
    %239 = vector.extract_strided_slice %238 {offsets = [0, 0], sizes = [8, 128], strides = [1, 1]} : vector<8x512xf32> to vector<8x128xf32>
    %cst_100 = arith.constant 5.000000e-01 : f32
    %240 = vector.broadcast %cst_100 : f32 to vector<8x128xf32>
    %241 = arith.mulf %240, %239 : vector<8x128xf32>
    %242 = math.tanh %241 : vector<8x128xf32>
    %cst_101 = arith.constant 5.000000e-01 : f32
    %243 = vector.broadcast %cst_101 : f32 to vector<8x128xf32>
    %244 = arith.mulf %243, %242 : vector<8x128xf32>
    %cst_102 = arith.constant 5.000000e-01 : f32
    %245 = vector.broadcast %cst_102 : f32 to vector<8x128xf32>
    %246 = arith.addf %244, %245 : vector<8x128xf32>
    %247 = vector.extract_strided_slice %238 {offsets = [0, 128], sizes = [8, 128], strides = [1, 1]} : vector<8x512xf32> to vector<8x128xf32>
    %cst_103 = arith.constant 5.000000e-01 : f32
    %248 = vector.broadcast %cst_103 : f32 to vector<8x128xf32>
    %249 = arith.mulf %248, %247 : vector<8x128xf32>
    %250 = math.tanh %249 : vector<8x128xf32>
    %cst_104 = arith.constant 5.000000e-01 : f32
    %251 = vector.broadcast %cst_104 : f32 to vector<8x128xf32>
    %252 = arith.mulf %251, %250 : vector<8x128xf32>
    %cst_105 = arith.constant 5.000000e-01 : f32
    %253 = vector.broadcast %cst_105 : f32 to vector<8x128xf32>
    %254 = arith.addf %252, %253 : vector<8x128xf32>
    %255 = vector.extract_strided_slice %238 {offsets = [0, 256], sizes = [8, 128], strides = [1, 1]} : vector<8x512xf32> to vector<8x128xf32>
    %256 = math.tanh %255 : vector<8x128xf32>
    %257 = vector.extract_strided_slice %238 {offsets = [0, 384], sizes = [8, 128], strides = [1, 1]} : vector<8x512xf32> to vector<8x128xf32>
    %cst_106 = arith.constant 5.000000e-01 : f32
    %258 = vector.broadcast %cst_106 : f32 to vector<8x128xf32>
    %259 = arith.mulf %258, %257 : vector<8x128xf32>
    %260 = math.tanh %259 : vector<8x128xf32>
    %cst_107 = arith.constant 5.000000e-01 : f32
    %261 = vector.broadcast %cst_107 : f32 to vector<8x128xf32>
    %262 = arith.mulf %261, %260 : vector<8x128xf32>
    %cst_108 = arith.constant 5.000000e-01 : f32
    %263 = vector.broadcast %cst_108 : f32 to vector<8x128xf32>
    %264 = arith.addf %262, %263 : vector<8x128xf32>
    %265 = arith.mulf %254, %230 : vector<8x128xf32>
    %266 = arith.mulf %246, %256 : vector<8x128xf32>
    %267 = arith.addf %265, %266 : vector<8x128xf32>
    %268 = math.tanh %267 : vector<8x128xf32>
    %269 = arith.mulf %264, %268 : vector<8x128xf32>
    %c7_i32 = arith.constant 7 : i32
    %270 = arith.index_cast %c7_i32 : i32 to index
    %c0_109 = arith.constant 0 : index
    %c0_110 = arith.constant 0 : index
    %271 = vector.load %arg8[%270, %c0_109, %c0_110] : memref<8x8x512xf32, #tpu.memory_space<vmem>>, vector<1x8x512xf32>
    %272 = vector.shape_cast %271 : vector<1x8x512xf32> to vector<8x512xf32>
    %c0_111 = arith.constant 0 : index
    %c0_112 = arith.constant 0 : index
    %273 = vector.load %arg3[%c0_111, %c0_112] : memref<128x512xf32, #tpu.memory_space<vmem>>, vector<128x512xf32>
    %cst_113 = arith.constant dense<0.000000e+00> : vector<8x512xf32>
    %274 = tpu.matmul %269, %273, %cst_113 {dimension_numbers = #tpu.dot_dimension_numbers<[1], [0], [0], [1], [0, 0, 1, 1], [], []>} : vector<8x128xf32>, vector<128x512xf32>, vector<8x512xf32> -> vector<8x512xf32>
    %275 = arith.addf %272, %274 : vector<8x512xf32>
    %276 = vector.extract_strided_slice %275 {offsets = [0, 0], sizes = [8, 128], strides = [1, 1]} : vector<8x512xf32> to vector<8x128xf32>
    %cst_114 = arith.constant 5.000000e-01 : f32
    %277 = vector.broadcast %cst_114 : f32 to vector<8x128xf32>
    %278 = arith.mulf %277, %276 : vector<8x128xf32>
    %279 = math.tanh %278 : vector<8x128xf32>
    %cst_115 = arith.constant 5.000000e-01 : f32
    %280 = vector.broadcast %cst_115 : f32 to vector<8x128xf32>
    %281 = arith.mulf %280, %279 : vector<8x128xf32>
    %cst_116 = arith.constant 5.000000e-01 : f32
    %282 = vector.broadcast %cst_116 : f32 to vector<8x128xf32>
    %283 = arith.addf %281, %282 : vector<8x128xf32>
    %284 = vector.extract_strided_slice %275 {offsets = [0, 128], sizes = [8, 128], strides = [1, 1]} : vector<8x512xf32> to vector<8x128xf32>
    %cst_117 = arith.constant 5.000000e-01 : f32
    %285 = vector.broadcast %cst_117 : f32 to vector<8x128xf32>
    %286 = arith.mulf %285, %284 : vector<8x128xf32>
    %287 = math.tanh %286 : vector<8x128xf32>
    %cst_118 = arith.constant 5.000000e-01 : f32
    %288 = vector.broadcast %cst_118 : f32 to vector<8x128xf32>
    %289 = arith.mulf %288, %287 : vector<8x128xf32>
    %cst_119 = arith.constant 5.000000e-01 : f32
    %290 = vector.broadcast %cst_119 : f32 to vector<8x128xf32>
    %291 = arith.addf %289, %290 : vector<8x128xf32>
    %292 = vector.extract_strided_slice %275 {offsets = [0, 256], sizes = [8, 128], strides = [1, 1]} : vector<8x512xf32> to vector<8x128xf32>
    %293 = math.tanh %292 : vector<8x128xf32>
    %294 = vector.extract_strided_slice %275 {offsets = [0, 384], sizes = [8, 128], strides = [1, 1]} : vector<8x512xf32> to vector<8x128xf32>
    %cst_120 = arith.constant 5.000000e-01 : f32
    %295 = vector.broadcast %cst_120 : f32 to vector<8x128xf32>
    %296 = arith.mulf %295, %294 : vector<8x128xf32>
    %297 = math.tanh %296 : vector<8x128xf32>
    %cst_121 = arith.constant 5.000000e-01 : f32
    %298 = vector.broadcast %cst_121 : f32 to vector<8x128xf32>
    %299 = arith.mulf %298, %297 : vector<8x128xf32>
    %cst_122 = arith.constant 5.000000e-01 : f32
    %300 = vector.broadcast %cst_122 : f32 to vector<8x128xf32>
    %301 = arith.addf %299, %300 : vector<8x128xf32>
    %302 = arith.mulf %291, %267 : vector<8x128xf32>
    %303 = arith.mulf %283, %293 : vector<8x128xf32>
    %304 = arith.addf %302, %303 : vector<8x128xf32>
    %305 = math.tanh %304 : vector<8x128xf32>
    %306 = arith.mulf %301, %305 : vector<8x128xf32>
    %c8_i32 = arith.constant 8 : i32
    %c0_123 = arith.constant 0 : index
    %c0_124 = arith.constant 0 : index
    %307 = vector.load %arg5[%c0_123, %c0_124] : memref<128x128xf32, #tpu.memory_space<vmem>>, vector<128x128xf32>
    %cst_125 = arith.constant dense<0.000000e+00> : vector<8x128xf32>
    %308 = tpu.matmul %306, %307, %cst_125 {dimension_numbers = #tpu.dot_dimension_numbers<[1], [0], [0], [1], [0, 0, 1, 1], [], []>} : vector<8x128xf32>, vector<128x128xf32>, vector<8x128xf32> -> vector<8x128xf32>
    %c0_126 = arith.constant 0 : index
    %c0_127 = arith.constant 0 : index
    %309 = vector.load %arg6[%c0_126, %c0_127] : memref<1x128xf32, #tpu.memory_space<vmem>>, vector<1x128xf32>
    %310 = vector.broadcast %309 : vector<1x128xf32> to vector<8x128xf32>
    %311 = arith.addf %308, %310 : vector<8x128xf32>
    %c0_128 = arith.constant 0 : index
    %c0_129 = arith.constant 0 : index
    %312 = vector.load %arg7[%c0_128, %c0_129] : memref<8x128xf32, #tpu.memory_space<vmem>>, vector<8x128xf32>
    tpu.vector_store %arg7[%c0_128, %c0_129], %311 {strides = array<i32>} : memref<8x128xf32, #tpu.memory_space<vmem>>, vector<8x128xf32>,
    return
  }
  func.func @transform_0(%arg0: i32) -> (i32, i32, i32) {
    %c0_i32 = arith.constant 0 : i32
    %c0_i32_0 = arith.constant 0 : i32
    %c0_i32_1 = arith.constant 0 : i32
    %c0_i32_2 = arith.constant 0 : i32
    return %c0_i32, %c0_i32_0, %c0_i32_1 : i32, i32, i32
  }
  func.func @transform_1(%arg0: i32) -> (i32, i32) {
    %c0_i32 = arith.constant 0 : i32
    %c0_i32_0 = arith.constant 0 : i32
    %c0_i32_1 = arith.constant 0 : i32
    return %c0_i32, %c0_i32_0 : i32, i32
  }
  func.func @transform_2(%arg0: i32) -> (i32, i32) {
    %c0_i32 = arith.constant 0 : i32
    %c0_i32_0 = arith.constant 0 : i32
    %c0_i32_1 = arith.constant 0 : i32
    return %c0_i32, %c0_i32_0 : i32, i32
  }
  func.func @transform_3(%arg0: i32) -> (i32, i32) {
    %c0_i32 = arith.constant 0 : i32
    %c0_i32_0 = arith.constant 0 : i32
    %c0_i32_1 = arith.constant 0 : i32
    return %c0_i32, %c0_i32_0 : i32, i32
  }
  func.func @transform_4(%arg0: i32) -> (i32, i32) {
    %c0_i32 = arith.constant 0 : i32
    %c0_i32_0 = arith.constant 0 : i32
    %c0_i32_1 = arith.constant 0 : i32
    return %c0_i32, %c0_i32_0 : i32, i32
  }
  func.func @transform_5(%arg0: i32) -> (i32, i32) {
    %c0_i32 = arith.constant 0 : i32
    %c0_i32_0 = arith.constant 0 : i32
    %c0_i32_1 = arith.constant 0 : i32
    return %c0_i32, %c0_i32_0 : i32, i32
  }
  func.func @transform_6(%arg0: i32) -> (i32, i32) {
    %c0_i32 = arith.constant 0 : i32
    %c0_i32_0 = arith.constant 0 : i32
    %c0_i32_1 = arith.constant 0 : i32
    return %c0_i32, %c0_i32_0 : i32, i32
  }
}

</mosaic_0001>

<llo_original>
// kernel: lstm_net_forward.1
$region0: #{lstm_net_forward.1}
  #allocation0 [shape = 'u32[]', space=smem, size = 0x4, offset = 0x4, fixed_abs, tag = 'smem constant byte address 0x4 - core index']
  #allocation1 [shape = 'u32[72,128]{1,0:T(1,128)}', space=vmem, size = 0x9000, scoped, tag = 'internal scratch']
  #allocation2 [shape = 'f32[8,8,512]{2,1,0:T(8,128)}', space=vmem, size = 0x20000, scoped, tag = 'scratch operand']
  %s0 = inlined_call_operand.vmem [shape: f32[8,8,28], index: 0, kind: input, shape index: {}]
  %s1 = inlined_call_operand.vmem [shape: f32[28,512], index: 1, kind: input, shape index: {}]
  %s2 = inlined_call_operand.vmem [shape: f32[128,512], index: 2, kind: input, shape index: {}]
  %s3 = inlined_call_operand.vmem [shape: f32[1,512], index: 3, kind: input, shape index: {}]
  %s4 = inlined_call_operand.vmem [shape: f32[128,128], index: 4, kind: input, shape index: {}]
  %s5 = inlined_call_operand.vmem [shape: f32[1,128], index: 5, kind: input, shape index: {}]
  %s6 = inlined_call_operand.vmem [shape: f32[8,128], index: 6, kind: output, shape index: {}]
  %s7 = sld [smem:[#allocation0]]
  $region34: #{lstm_net_forward.1} parent=0
    _
  %s9 = ssub.s32 1, %s7
  %s10 = scalar_select 0, %s9, %s7
  // Predicated region
  $region2: #{lstm_net_forward.1} parent=0 // pred_check
    _
  $region3: #{lstm_net_forward.1} parent=0 // pred_check_branch
    %12 = sbr.rel (0) target = $region5
  $region4: #{lstm_net_forward.1} parent=0 // pred_region
    _
  $region5: #{lstm_net_forward.1} parent=0 // pred_fallthru
    _
  // Predicated region
  $region6: #{lstm_net_forward.1} parent=0 // pred_check
    _
  $region7: #{lstm_net_forward.1} parent=0 // pred_check_branch
    %14 = sbr.rel (0) target = $region9
  $region8: #{lstm_net_forward.1} parent=0 // pred_region
    _
  $region9: #{lstm_net_forward.1} parent=0 // pred_fallthru
    _
  // Predicated region
  $region10: #{lstm_net_forward.1} parent=0 // pred_check
    _
  $region11: #{lstm_net_forward.1} parent=0 // pred_check_branch
    %16 = sbr.rel (0) target = $region13
  $region12: #{lstm_net_forward.1} parent=0 // pred_region
    _
  $region13: #{lstm_net_forward.1} parent=0 // pred_fallthru
    _
  // Predicated region
  $region14: #{lstm_net_forward.1} parent=0 // pred_check
    _
  $region15: #{lstm_net_forward.1} parent=0 // pred_check_branch
    %18 = sbr.rel (0) target = $region17
  $region16: #{lstm_net_forward.1} parent=0 // pred_region
    _
  $region17: #{lstm_net_forward.1} parent=0 // pred_fallthru
    _
  // Predicated region
  $region18: #{lstm_net_forward.1} parent=0 // pred_check
    _
  $region19: #{lstm_net_forward.1} parent=0 // pred_check_branch
    %20 = sbr.rel (0) target = $region21
  $region20: #{lstm_net_forward.1} parent=0 // pred_region
    _
  $region21: #{lstm_net_forward.1} parent=0 // pred_fallthru
    _
  // Predicated region
  $region22: #{lstm_net_forward.1} parent=0 // pred_check
    _
  $region23: #{lstm_net_forward.1} parent=0 // pred_check_branch
    %22 = sbr.rel (0) target = $region25
  $region24: #{lstm_net_forward.1} parent=0 // pred_region
    _
  $region25: #{lstm_net_forward.1} parent=0 // pred_fallthru
    _
  %v23 = vld [vmem:[%s0] sm:$0xff]
  %v24 = vld [vmem:[%s0 + $0x8] sm:$0xff]
  %v25 = vld [vmem:[%s0 + $0x10] sm:$0xff]
  %v26 = vld [vmem:[%s0 + $0x18] sm:$0xff]
  %v27 = vld [vmem:[%s0 + $0x20] sm:$0xff]
  %v28 = vld [vmem:[%s0 + $0x28] sm:$0xff]
  %v29 = vld [vmem:[%s0 + $0x30] sm:$0xff]
  %v30 = vld [vmem:[%s0 + $0x38] sm:$0xff]
  %v31 = vld [vmem:[%s1] sm:$0xff]
  %v32 = vld [vmem:[%s1 + $0x8] sm:$0xff]
  %v33 = vld [vmem:[%s1 + $0x10] sm:$0xff]
  %v34 = vld [vmem:[%s1 + $0x18] sm:$0xff]
  %v35 = vld [vmem:[%s1 + $0x20] sm:$0xff]
  %v36 = vld [vmem:[%s1 + $0x28] sm:$0xff]
  %v37 = vld [vmem:[%s1 + $0x30] sm:$0xff]
  %v38 = vld [vmem:[%s1 + $0x38] sm:$0xff]
  %v39 = vld [vmem:[%s1 + $0x40] sm:$0xff]
  %v40 = vld [vmem:[%s1 + $0x48] sm:$0xff]
  %v41 = vld [vmem:[%s1 + $0x50] sm:$0xff]
  %v42 = vld [vmem:[%s1 + $0x58] sm:$0xff]
  %v43 = vld [vmem:[%s1 + $0x60] sm:$0xf]
  %v44 = vld [vmem:[%s1 + $0x68] sm:$0xf]
  %v45 = vld [vmem:[%s1 + $0x70] sm:$0xf]
  %v46 = vld [vmem:[%s1 + $0x78] sm:$0xf]
  %v47 = vld [vmem:[%s3] sm:$0xf]
  %v49 = vperm.slane %v47, 0
  %v50 = vperm.slane %v47, 1
  %v51 = vperm.slane %v47, 2
  %v52 = vperm.slane %v47, 3
  %vm57 = vcmask 228352
  %v59 = vsel %vm57, %v23, 0
  %v62 = vsel %vm57, %v24, 0
  %v65 = vsel %vm57, %v25, 0
  %v68 = vsel %vm57, %v26, 0
  %v71 = vsel %vm57, %v27, 0
  %v74 = vsel %vm57, %v28, 0
  %v77 = vsel %vm57, %v29, 0
  %v80 = vsel %vm57, %v30, 0
  %vm82 = vcmask 1043456
  %v84 = vsel %vm82, %v43, 0
  %v87 = vsel %vm82, %v44, 0
  %v90 = vsel %vm82, %v45, 0
  %v93 = vsel %vm82, %v46, 0
  %95 = vmatpush.msra.mxu0 0.0
  %96 = vmatpush.msra.mxu0 0.0
  %97 = vmatpush.msra.mxu0 0.0
  %98 = vmatpush.msra.mxu0 0.0
  %99 = vmatpush.msra.mxu0 0.0
  %100 = vmatpush.msra.mxu0 0.0
  %101 = vmatpush.msra.mxu0 0.0
  %102 = vmatpush.msra.mxu0 0.0
  %103 = vmatpush.msra.mxu0 0.0
  %104 = vmatpush.msra.mxu0 0.0
  %105 = vmatpush.msra.mxu0 0.0
  %106 = vmatpush.msra.mxu0 0.0
  %107 = vmatpush.msra.mxu0 %v84
  %108 = vmatpush.msra.mxu0 %v39
  %109 = vmatpush.msra.mxu0 %v35
  %110 = vmatpush.msra.mxu0 %v31
  %111 = vmatmul.f32.gmra.mxu0 %v59
  %v112 = vpop.f32.mrf.mxu0
  %v113 = vadd.f32 %v49, %v112
  %114 = vmatmul.f32.gmra.mxu0 %v62
  %v115 = vpop.f32.mrf.mxu0
  %v116 = vadd.f32 %v49, %v115
  %117 = vmatmul.f32.gmra.mxu0 %v65
  %v118 = vpop.f32.mrf.mxu0
  %v119 = vadd.f32 %v49, %v118
  %120 = vmatmul.f32.gmra.mxu0 %v68
  %v121 = vpop.f32.mrf.mxu0
  %v122 = vadd.f32 %v49, %v121
  %123 = vmatmul.f32.gmra.mxu0 %v71
  %v124 = vpop.f32.mrf.mxu0
  %v125 = vadd.f32 %v49, %v124
  %126 = vmatmul.f32.gmra.mxu0 %v74
  %v127 = vpop.f32.mrf.mxu0
  %v128 = vadd.f32 %v49, %v127
  %129 = vmatmul.f32.gmra.mxu0 %v77
  %v130 = vpop.f32.mrf.mxu0
  %v131 = vadd.f32 %v49, %v130
  %132 = vmatmul.f32.gmra.mxu0 %v80
  %v133 = vpop.f32.mrf.mxu0
  %v134 = vadd.f32 %v49, %v133
  %135 = vdwg.mxu0
  %136 = vmatpush.msra.mxu0 0.0
  %137 = vmatpush.msra.mxu0 0.0
  %138 = vmatpush.msra.mxu0 0.0
  %139 = vmatpush.msra.mxu0 0.0
  %140 = vmatpush.msra.mxu0 0.0
  %141 = vmatpush.msra.mxu0 0.0
  %142 = vmatpush.msra.mxu0 0.0
  %143 = vmatpush.msra.mxu0 0.0
  %144 = vmatpush.msra.mxu0 0.0
  %145 = vmatpush.msra.mxu0 0.0
  %146 = vmatpush.msra.mxu0 0.0
  %147 = vmatpush.msra.mxu0 0.0
  %148 = vmatpush.msra.mxu0 %v87
  %149 = vmatpush.msra.mxu0 %v40
  %150 = vmatpush.msra.mxu0 %v36
  %151 = vmatpush.msra.mxu0 %v32
  %152 = vmatmul.f32.gmra.mxu0 %v59
  %v153 = vpop.f32.mrf.mxu0
  %v154 = vadd.f32 %v50, %v153
  %155 = vmatmul.f32.gmra.mxu0 %v62
  %v156 = vpop.f32.mrf.mxu0
  %v157 = vadd.f32 %v50, %v156
  %158 = vmatmul.f32.gmra.mxu0 %v65
  %v159 = vpop.f32.mrf.mxu0
  %v160 = vadd.f32 %v50, %v159
  %161 = vmatmul.f32.gmra.mxu0 %v68
  %v162 = vpop.f32.mrf.mxu0
  %v163 = vadd.f32 %v50, %v162
  %164 = vmatmul.f32.gmra.mxu0 %v71
  %v165 = vpop.f32.mrf.mxu0
  %v166 = vadd.f32 %v50, %v165
  %167 = vmatmul.f32.gmra.mxu0 %v74
  %v168 = vpop.f32.mrf.mxu0
  %v169 = vadd.f32 %v50, %v168
  %170 = vmatmul.f32.gmra.mxu0 %v77
  %v171 = vpop.f32.mrf.mxu0
  %v172 = vadd.f32 %v50, %v171
  %173 = vmatmul.f32.gmra.mxu0 %v80
  %v174 = vpop.f32.mrf.mxu0
  %v175 = vadd.f32 %v50, %v174
  %176 = vdwg.mxu0
  %177 = vmatpush.msra.mxu0 0.0
  %178 = vmatpush.msra.mxu0 0.0
  %179 = vmatpush.msra.mxu0 0.0
  %180 = vmatpush.msra.mxu0 0.0
  %181 = vmatpush.msra.mxu0 0.0
  %182 = vmatpush.msra.mxu0 0.0
  %183 = vmatpush.msra.mxu0 0.0
  %184 = vmatpush.msra.mxu0 0.0
  %185 = vmatpush.msra.mxu0 0.0
  %186 = vmatpush.msra.mxu0 0.0
  %187 = vmatpush.msra.mxu0 0.0
  %188 = vmatpush.msra.mxu0 0.0
  %189 = vmatpush.msra.mxu0 %v90
  %190 = vmatpush.msra.mxu0 %v41
  %191 = vmatpush.msra.mxu0 %v37
  %192 = vmatpush.msra.mxu0 %v33
  %193 = vmatmul.f32.gmra.mxu0 %v59
  %v194 = vpop.f32.mrf.mxu0
  %v195 = vadd.f32 %v51, %v194
  %196 = vmatmul.f32.gmra.mxu0 %v62
  %v197 = vpop.f32.mrf.mxu0
  %v198 = vadd.f32 %v51, %v197
  %199 = vmatmul.f32.gmra.mxu0 %v65
  %v200 = vpop.f32.mrf.mxu0
  %v201 = vadd.f32 %v51, %v200
  %202 = vmatmul.f32.gmra.mxu0 %v68
  %v203 = vpop.f32.mrf.mxu0
  %v204 = vadd.f32 %v51, %v203
  %205 = vmatmul.f32.gmra.mxu0 %v71
  %v206 = vpop.f32.mrf.mxu0
  %v207 = vadd.f32 %v51, %v206
  %208 = vmatmul.f32.gmra.mxu0 %v74
  %v209 = vpop.f32.mrf.mxu0
  %v210 = vadd.f32 %v51, %v209
  %211 = vmatmul.f32.gmra.mxu0 %v77
  %v212 = vpop.f32.mrf.mxu0
  %v213 = vadd.f32 %v51, %v212
  %214 = vmatmul.f32.gmra.mxu0 %v80
  %v215 = vpop.f32.mrf.mxu0
  %v216 = vadd.f32 %v51, %v215
  %217 = vdwg.mxu0
  %218 = vmatpush.msra.mxu0 0.0
  %219 = vmatpush.msra.mxu0 0.0
  %220 = vmatpush.msra.mxu0 0.0
  %221 = vmatpush.msra.mxu0 0.0
  %222 = vmatpush.msra.mxu0 0.0
  %223 = vmatpush.msra.mxu0 0.0
  %224 = vmatpush.msra.mxu0 0.0
  %225 = vmatpush.msra.mxu0 0.0
  %226 = vmatpush.msra.mxu0 0.0
  %227 = vmatpush.msra.mxu0 0.0
  %228 = vmatpush.msra.mxu0 0.0
  %229 = vmatpush.msra.mxu0 0.0
  %230 = vmatpush.msra.mxu0 %v93
  %231 = vmatpush.msra.mxu0 %v42
  %232 = vmatpush.msra.mxu0 %v38
  %233 = vmatpush.msra.mxu0 %v34
  %234 = vmatmul.f32.gmra.mxu0 %v59
  %v235 = vpop.f32.mrf.mxu0
  %v236 = vadd.f32 %v52, %v235
  %237 = vmatmul.f32.gmra.mxu0 %v62
  %v238 = vpop.f32.mrf.mxu0
  %v239 = vadd.f32 %v52, %v238
  %240 = vmatmul.f32.gmra.mxu0 %v65
  %v241 = vpop.f32.mrf.mxu0
  %v242 = vadd.f32 %v52, %v241
  %243 = vmatmul.f32.gmra.mxu0 %v68
  %v244 = vpop.f32.mrf.mxu0
  %v245 = vadd.f32 %v52, %v244
  %246 = vmatmul.f32.gmra.mxu0 %v71
  %v247 = vpop.f32.mrf.mxu0
  %v248 = vadd.f32 %v52, %v247
  %249 = vmatmul.f32.gmra.mxu0 %v74
  %v250 = vpop.f32.mrf.mxu0
  %v251 = vadd.f32 %v52, %v250
  %252 = vmatmul.f32.gmra.mxu0 %v77
  %v253 = vpop.f32.mrf.mxu0
  %v254 = vadd.f32 %v52, %v253
  %255 = vmatmul.f32.gmra.mxu0 %v80
  %v256 = vpop.f32.mrf.mxu0
  %v257 = vadd.f32 %v52, %v256
  %258 = vdwg.mxu0
  %259 = vst [vmem:[#allocation2] sm:$0xff] %v113
  %260 = vst [vmem:[#allocation2 + $0x8] sm:$0xff] %v154
  %261 = vst [vmem:[#allocation2 + $0x10] sm:$0xff] %v195
  %262 = vst [vmem:[#allocation2 + $0x18] sm:$0xff] %v236
  %263 = vst [vmem:[#allocation2 + $0x20] sm:$0xff] %v116
  %264 = vst [vmem:[#allocation2 + $0x28] sm:$0xff] %v157
  %265 = vst [vmem:[#allocation2 + $0x30] sm:$0xff] %v198
  %266 = vst [vmem:[#allocation2 + $0x38] sm:$0xff] %v239
  %267 = vst [vmem:[#allocation2 + $0x40] sm:$0xff] %v119
  %268 = vst [vmem:[#allocation2 + $0x48] sm:$0xff] %v160
  %269 = vst [vmem:[#allocation2 + $0x50] sm:$0xff] %v201
  %270 = vst [vmem:[#allocation2 + $0x58] sm:$0xff] %v242
  %271 = vst [vmem:[#allocation2 + $0x60] sm:$0xff] %v122
  %272 = vst [vmem:[#allocation2 + $0x68] sm:$0xff] %v163
  %273 = vst [vmem:[#allocation2 + $0x70] sm:$0xff] %v204
  %274 = vst [vmem:[#allocation2 + $0x78] sm:$0xff] %v245
  %275 = vst [vmem:[#allocation2 + $0x80] sm:$0xff] %v125
  %276 = vst [vmem:[#allocation2 + $0x88] sm:$0xff] %v166
  %277 = vst [vmem:[#allocation2 + $0x90] sm:$0xff] %v207
  %278 = vst [vmem:[#allocation2 + $0x98] sm:$0xff] %v248
  %279 = vst [vmem:[#allocation2 + $0xa0] sm:$0xff] %v128
  %280 = vst [vmem:[#allocation2 + $0xa8] sm:$0xff] %v169
  %281 = vst [vmem:[#allocation2 + $0xb0] sm:$0xff] %v210
  %282 = vst [vmem:[#allocation2 + $0xb8] sm:$0xff] %v251
  %283 = vst [vmem:[#allocation2 + $0xc0] sm:$0xff] %v131
  %284 = vst [vmem:[#allocation2 + $0xc8] sm:$0xff] %v172
  %285 = vst [vmem:[#allocation2 + $0xd0] sm:$0xff] %v213
  %286 = vst [vmem:[#allocation2 + $0xd8] sm:$0xff] %v254
  %287 = vst [vmem:[#allocation2 + $0xe0] sm:$0xff] %v134
  %288 = vst [vmem:[#allocation2 + $0xe8] sm:$0xff] %v175
  %289 = vst [vmem:[#allocation2 + $0xf0] sm:$0xff] %v216
  %290 = vst [vmem:[#allocation2 + $0xf8] sm:$0xff] %v257
  %v291 = vld [vmem:[#allocation2] sm:$0xff]
  %v292 = vld [vmem:[#allocation2 + $0x8] sm:$0xff]
  %v293 = vld [vmem:[#allocation2 + $0x10] sm:$0xff]
  %v294 = vld [vmem:[#allocation2 + $0x18] sm:$0xff]
  %v295 = vld [vmem:[%s2] sm:$0xff]
  %v296 = vld [vmem:[%s2 + $0x8] sm:$0xff]
  %v297 = vld [vmem:[%s2 + $0x10] sm:$0xff]
  %v298 = vld [vmem:[%s2 + $0x18] sm:$0xff]
  %v299 = vld [vmem:[%s2 + $0x20] sm:$0xff]
  %v300 = vld [vmem:[%s2 + $0x28] sm:$0xff]
  %v301 = vld [vmem:[%s2 + $0x30] sm:$0xff]
  %v302 = vld [vmem:[%s2 + $0x38] sm:$0xff]
  %v303 = vld [vmem:[%s2 + $0x40] sm:$0xff]
  %v304 = vld [vmem:[%s2 + $0x48] sm:$0xff]
  %v305 = vld [vmem:[%s2 + $0x50] sm:$0xff]
  %v306 = vld [vmem:[%s2 + $0x58] sm:$0xff]
  %v307 = vld [vmem:[%s2 + $0x60] sm:$0xff]
  %v308 = vld [vmem:[%s2 + $0x68] sm:$0xff]
  %v309 = vld [vmem:[%s2 + $0x70] sm:$0xff]
  %v310 = vld [vmem:[%s2 + $0x78] sm:$0xff]
  %v311 = vld [vmem:[%s2 + $0x80] sm:$0xff]
  %v312 = vld [vmem:[%s2 + $0x88] sm:$0xff]
  %v313 = vld [vmem:[%s2 + $0x90] sm:$0xff]
  %v314 = vld [vmem:[%s2 + $0x98] sm:$0xff]
  %v315 = vld [vmem:[%s2 + $0xa0] sm:$0xff]
  %v316 = vld [vmem:[%s2 + $0xa8] sm:$0xff]
  %v317 = vld [vmem:[%s2 + $0xb0] sm:$0xff]
  %v318 = vld [vmem:[%s2 + $0xb8] sm:$0xff]
  %v319 = vld [vmem:[%s2 + $0xc0] sm:$0xff]
  %v320 = vld [vmem:[%s2 + $0xc8] sm:$0xff]
  %v321 = vld [vmem:[%s2 + $0xd0] sm:$0xff]
  %v322 = vld [vmem:[%s2 + $0xd8] sm:$0xff]
  %v323 = vld [vmem:[%s2 + $0xe0] sm:$0xff]
  %v324 = vld [vmem:[%s2 + $0xe8] sm:$0xff]
  %v325 = vld [vmem:[%s2 + $0xf0] sm:$0xff]
  %v326 = vld [vmem:[%s2 + $0xf8] sm:$0xff]
  %v327 = vld [vmem:[%s2 + $0x100] sm:$0xff]
  %v328 = vld [vmem:[%s2 + $0x108] sm:$0xff]
  %v329 = vld [vmem:[%s2 + $0x110] sm:$0xff]
  %v330 = vld [vmem:[%s2 + $0x118] sm:$0xff]
  %v331 = vld [vmem:[%s2 + $0x120] sm:$0xff]
  %v332 = vld [vmem:[%s2 + $0x128] sm:$0xff]
  %v333 = vld [vmem:[%s2 + $0x130] sm:$0xff]
  %v334 = vld [vmem:[%s2 + $0x138] sm:$0xff]
  %v335 = vld [vmem:[%s2 + $0x140] sm:$0xff]
  %v336 = vld [vmem:[%s2 + $0x148] sm:$0xff]
  %v337 = vld [vmem:[%s2 + $0x150] sm:$0xff]
  %v338 = vld [vmem:[%s2 + $0x158] sm:$0xff]
  %v339 = vld [vmem:[%s2 + $0x160] sm:$0xff]
  %v340 = vld [vmem:[%s2 + $0x168] sm:$0xff]
  %v341 = vld [vmem:[%s2 + $0x170] sm:$0xff]
  %v342 = vld [vmem:[%s2 + $0x178] sm:$0xff]
  %v343 = vld [vmem:[%s2 + $0x180] sm:$0xff]
  %v344 = vld [vmem:[%s2 + $0x188] sm:$0xff]
  %v345 = vld [vmem:[%s2 + $0x190] sm:$0xff]
  %v346 = vld [vmem:[%s2 + $0x198] sm:$0xff]
  %v347 = vld [vmem:[%s2 + $0x1a0] sm:$0xff]
  %v348 = vld [vmem:[%s2 + $0x1a8] sm:$0xff]
  %v349 = vld [vmem:[%s2 + $0x1b0] sm:$0xff]
  %v350 = vld [vmem:[%s2 + $0x1b8] sm:$0xff]
  %v351 = vld [vmem:[%s2 + $0x1c0] sm:$0xff]
  %v352 = vld [vmem:[%s2 + $0x1c8] sm:$0xff]
  %v353 = vld [vmem:[%s2 + $0x1d0] sm:$0xff]
  %v354 = vld [vmem:[%s2 + $0x1d8] sm:$0xff]
  %v355 = vld [vmem:[%s2 + $0x1e0] sm:$0xff]
  %v356 = vld [vmem:[%s2 + $0x1e8] sm:$0xff]
  %v357 = vld [vmem:[%s2 + $0x1f0] sm:$0xff]
  %v358 = vld [vmem:[%s2 + $0x1f8] sm:$0xff]
  %359 = vmatpush.msra.mxu0 %v355
  %360 = vmatpush.msra.mxu0 %v351
  %361 = vmatpush.msra.mxu0 %v347
  %362 = vmatpush.msra.mxu0 %v343
  %363 = vmatpush.msra.mxu0 %v339
  %364 = vmatpush.msra.mxu0 %v335
  %365 = vmatpush.msra.mxu0 %v331
  %366 = vmatpush.msra.mxu0 %v327
  %367 = vmatpush.msra.mxu0 %v323
  %368 = vmatpush.msra.mxu0 %v319
  %369 = vmatpush.msra.mxu0 %v315
  %370 = vmatpush.msra.mxu0 %v311
  %371 = vmatpush.msra.mxu0 %v307
  %372 = vmatpush.msra.mxu0 %v303
  %373 = vmatpush.msra.mxu0 %v299
  %374 = vmatpush.msra.mxu0 %v295
  %375 = vmatmul.f32.gmra.mxu0 0.0
  %v376 = vpop.f32.mrf.mxu0
  %v377 = vadd.f32 0.0, %v376
  %378 = vdwg.mxu0
  %379 = vmatpush.msra.mxu0 %v356
  %380 = vmatpush.msra.mxu0 %v352
  %381 = vmatpush.msra.mxu0 %v348
  %382 = vmatpush.msra.mxu0 %v344
  %383 = vmatpush.msra.mxu0 %v340
  %384 = vmatpush.msra.mxu0 %v336
  %385 = vmatpush.msra.mxu0 %v332
  %386 = vmatpush.msra.mxu0 %v328
  %387 = vmatpush.msra.mxu0 %v324
  %388 = vmatpush.msra.mxu0 %v320
  %389 = vmatpush.msra.mxu0 %v316
  %390 = vmatpush.msra.mxu0 %v312
  %391 = vmatpush.msra.mxu0 %v308
  %392 = vmatpush.msra.mxu0 %v304
  %393 = vmatpush.msra.mxu0 %v300
  %394 = vmatpush.msra.mxu0 %v296
  %395 = vmatmul.f32.gmra.mxu0 0.0
  %v396 = vpop.f32.mrf.mxu0
  %v397 = vadd.f32 0.0, %v396
  %398 = vdwg.mxu0
  %399 = vmatpush.msra.mxu0 %v357
  %400 = vmatpush.msra.mxu0 %v353
  %401 = vmatpush.msra.mxu0 %v349
  %402 = vmatpush.msra.mxu0 %v345
  %403 = vmatpush.msra.mxu0 %v341
  %404 = vmatpush.msra.mxu0 %v337
  %405 = vmatpush.msra.mxu0 %v333
  %406 = vmatpush.msra.mxu0 %v329
  %407 = vmatpush.msra.mxu0 %v325
  %408 = vmatpush.msra.mxu0 %v321
  %409 = vmatpush.msra.mxu0 %v317
  %410 = vmatpush.msra.mxu0 %v313
  %411 = vmatpush.msra.mxu0 %v309
  %412 = vmatpush.msra.mxu0 %v305
  %413 = vmatpush.msra.mxu0 %v301
  %414 = vmatpush.msra.mxu0 %v297
  %415 = vmatmul.f32.gmra.mxu0 0.0
  %v416 = vpop.f32.mrf.mxu0
  %v417 = vadd.f32 0.0, %v416
  %418 = vdwg.mxu0
  %419 = vmatpush.msra.mxu0 %v358
  %420 = vmatpush.msra.mxu0 %v354
  %421 = vmatpush.msra.mxu0 %v350
  %422 = vmatpush.msra.mxu0 %v346
  %423 = vmatpush.msra.mxu0 %v342
  %424 = vmatpush.msra.mxu0 %v338
  %425 = vmatpush.msra.mxu0 %v334
  %426 = vmatpush.msra.mxu0 %v330
  %427 = vmatpush.msra.mxu0 %v326
  %428 = vmatpush.msra.mxu0 %v322
  %429 = vmatpush.msra.mxu0 %v318
  %430 = vmatpush.msra.mxu0 %v314
  %431 = vmatpush.msra.mxu0 %v310
  %432 = vmatpush.msra.mxu0 %v306
  %433 = vmatpush.msra.mxu0 %v302
  %434 = vmatpush.msra.mxu0 %v298
  %435 = vmatmul.f32.gmra.mxu0 0.0
  %v436 = vpop.f32.mrf.mxu0
  %v437 = vadd.f32 0.0, %v436
  %438 = vdwg.mxu0
  %v439 = vadd.f32 %v291, %v377
  %v440 = vadd.f32 %v292, %v397
  %v441 = vadd.f32 %v293, %v417
  %v442 = vadd.f32 %v294, %v437
  %v443 = vmul.f32 %v439, 0.5
  %v444 = vtanh.pop %v443
  %v445 = vmul.f32 %v444, 0.5
  %v446 = vadd.f32 %v445, 0.5
  %v447 = vmul.f32 %v440, 0.5
  %v448 = vtanh.pop %v447
  %v449 = vmul.f32 %v448, 0.5
  %v450 = vadd.f32 %v449, 0.5
  %v451 = vtanh.pop %v441
  %v452 = vmul.f32 %v442, 0.5
  %v453 = vtanh.pop %v452
  %v454 = vmul.f32 %v453, 0.5
  %v455 = vadd.f32 %v454, 0.5
  %v456 = vmul.f32 %v450, 0.0
  %v457 = vmul.f32 %v446, %v451
  %v458 = vadd.f32 %v456, %v457
  %v459 = vtanh.pop %v458
  %v460 = vmul.f32 %v455, %v459
  %s461 = scalar_lea.vmem [#allocation2], 32
  %v462 = vld [vmem:[%s461] sm:$0xff]
  %v463 = vld [vmem:[%s461 + $0x8] sm:$0xff]
  %v464 = vld [vmem:[%s461 + $0x10] sm:$0xff]
  %v465 = vld [vmem:[%s461 + $0x18] sm:$0xff]
  %466 = vmatpush.msra.mxu0 %v355
  %467 = vmatpush.msra.mxu0 %v351
  %468 = vmatpush.msra.mxu0 %v347
  %469 = vmatpush.msra.mxu0 %v343
  %470 = vmatpush.msra.mxu0 %v339
  %471 = vmatpush.msra.mxu0 %v335
  %472 = vmatpush.msra.mxu0 %v331
  %473 = vmatpush.msra.mxu0 %v327
  %474 = vmatpush.msra.mxu0 %v323
  %475 = vmatpush.msra.mxu0 %v319
  %476 = vmatpush.msra.mxu0 %v315
  %477 = vmatpush.msra.mxu0 %v311
  %478 = vmatpush.msra.mxu0 %v307
  %479 = vmatpush.msra.mxu0 %v303
  %480 = vmatpush.msra.mxu0 %v299
  %481 = vmatpush.msra.mxu0 %v295
  %482 = vmatmul.f32.gmra.mxu0 %v460
  %v483 = vpop.f32.mrf.mxu0
  %v484 = vadd.f32 0.0, %v483
  %485 = vdwg.mxu0
  %486 = vmatpush.msra.mxu0 %v356
  %487 = vmatpush.msra.mxu0 %v352
  %488 = vmatpush.msra.mxu0 %v348
  %489 = vmatpush.msra.mxu0 %v344
  %490 = vmatpush.msra.mxu0 %v340
  %491 = vmatpush.msra.mxu0 %v336
  %492 = vmatpush.msra.mxu0 %v332
  %493 = vmatpush.msra.mxu0 %v328
  %494 = vmatpush.msra.mxu0 %v324
  %495 = vmatpush.msra.mxu0 %v320
  %496 = vmatpush.msra.mxu0 %v316
  %497 = vmatpush.msra.mxu0 %v312
  %498 = vmatpush.msra.mxu0 %v308
  %499 = vmatpush.msra.mxu0 %v304
  %500 = vmatpush.msra.mxu0 %v300
  %501 = vmatpush.msra.mxu0 %v296
  %502 = vmatmul.f32.gmra.mxu0 %v460
  %v503 = vpop.f32.mrf.mxu0
  %v504 = vadd.f32 0.0, %v503
  %505 = vdwg.mxu0
  %506 = vmatpush.msra.mxu0 %v357
  %507 = vmatpush.msra.mxu0 %v353
  %508 = vmatpush.msra.mxu0 %v349
  %509 = vmatpush.msra.mxu0 %v345
  %510 = vmatpush.msra.mxu0 %v341
  %511 = vmatpush.msra.mxu0 %v337
  %512 = vmatpush.msra.mxu0 %v333
  %513 = vmatpush.msra.mxu0 %v329
  %514 = vmatpush.msra.mxu0 %v325
  %515 = vmatpush.msra.mxu0 %v321
  %516 = vmatpush.msra.mxu0 %v317
  %517 = vmatpush.msra.mxu0 %v313
  %518 = vmatpush.msra.mxu0 %v309
  %519 = vmatpush.msra.mxu0 %v305
  %520 = vmatpush.msra.mxu0 %v301
  %521 = vmatpush.msra.mxu0 %v297
  %522 = vmatmul.f32.gmra.mxu0 %v460
  %v523 = vpop.f32.mrf.mxu0
  %v524 = vadd.f32 0.0, %v523
  %525 = vdwg.mxu0
  %526 = vmatpush.msra.mxu0 %v358
  %527 = vmatpush.msra.mxu0 %v354
  %528 = vmatpush.msra.mxu0 %v350
  %529 = vmatpush.msra.mxu0 %v346
  %530 = vmatpush.msra.mxu0 %v342
  %531 = vmatpush.msra.mxu0 %v338
  %532 = vmatpush.msra.mxu0 %v334
  %533 = vmatpush.msra.mxu0 %v330
  %534 = vmatpush.msra.mxu0 %v326
  %535 = vmatpush.msra.mxu0 %v322
  %536 = vmatpush.msra.mxu0 %v318
  %537 = vmatpush.msra.mxu0 %v314
  %538 = vmatpush.msra.mxu0 %v310
  %539 = vmatpush.msra.mxu0 %v306
  %540 = vmatpush.msra.mxu0 %v302
  %541 = vmatpush.msra.mxu0 %v298
  %542 = vmatmul.f32.gmra.mxu0 %v460
  %v543 = vpop.f32.mrf.mxu0
  %v544 = vadd.f32 0.0, %v543
  %545 = vdwg.mxu0
  %v546 = vadd.f32 %v462, %v484
  %v547 = vadd.f32 %v463, %v504
  %v548 = vadd.f32 %v464, %v524
  %v549 = vadd.f32 %v465, %v544
  %v550 = vmul.f32 %v546, 0.5
  %v551 = vtanh.pop %v550
  %v552 = vmul.f32 %v551, 0.5
  %v553 = vadd.f32 %v552, 0.5
  %v554 = vmul.f32 %v547, 0.5
  %v555 = vtanh.pop %v554
  %v556 = vmul.f32 %v555, 0.5
  %v557 = vadd.f32 %v556, 0.5
  %v558 = vtanh.pop %v548
  %v559 = vmul.f32 %v549, 0.5
  %v560 = vtanh.pop %v559
  %v561 = vmul.f32 %v560, 0.5
  %v562 = vadd.f32 %v561, 0.5
  %v563 = vmul.f32 %v557, %v458
  %v564 = vmul.f32 %v553, %v558
  %v565 = vadd.f32 %v563, %v564
  %v566 = vtanh.pop %v565
  %v567 = vmul.f32 %v562, %v566
  %s568 = scalar_lea.vmem [#allocation2], 64
  %v569 = vld [vmem:[%s568] sm:$0xff]
  %v570 = vld [vmem:[%s568 + $0x8] sm:$0xff]
  %v571 = vld [vmem:[%s568 + $0x10] sm:$0xff]
  %v572 = vld [vmem:[%s568 + $0x18] sm:$0xff]
  %573 = vmatpush.msra.mxu0 %v355
  %574 = vmatpush.msra.mxu0 %v351
  %575 = vmatpush.msra.mxu0 %v347
  %576 = vmatpush.msra.mxu0 %v343
  %577 = vmatpush.msra.mxu0 %v339
  %578 = vmatpush.msra.mxu0 %v335
  %579 = vmatpush.msra.mxu0 %v331
  %580 = vmatpush.msra.mxu0 %v327
  %581 = vmatpush.msra.mxu0 %v323
  %582 = vmatpush.msra.mxu0 %v319
  %583 = vmatpush.msra.mxu0 %v315
  %584 = vmatpush.msra.mxu0 %v311
  %585 = vmatpush.msra.mxu0 %v307
  %586 = vmatpush.msra.mxu0 %v303
  %587 = vmatpush.msra.mxu0 %v299
  %588 = vmatpush.msra.mxu0 %v295
  %589 = vmatmul.f32.gmra.mxu0 %v567
  %v590 = vpop.f32.mrf.mxu0
  %v591 = vadd.f32 0.0, %v590
  %592 = vdwg.mxu0
  %593 = vmatpush.msra.mxu0 %v356
  %594 = vmatpush.msra.mxu0 %v352
  %595 = vmatpush.msra.mxu0 %v348
  %596 = vmatpush.msra.mxu0 %v344
  %597 = vmatpush.msra.mxu0 %v340
  %598 = vmatpush.msra.mxu0 %v336
  %599 = vmatpush.msra.mxu0 %v332
  %600 = vmatpush.msra.mxu0 %v328
  %601 = vmatpush.msra.mxu0 %v324
  %602 = vmatpush.msra.mxu0 %v320
  %603 = vmatpush.msra.mxu0 %v316
  %604 = vmatpush.msra.mxu0 %v312
  %605 = vmatpush.msra.mxu0 %v308
  %606 = vmatpush.msra.mxu0 %v304
  %607 = vmatpush.msra.mxu0 %v300
  %608 = vmatpush.msra.mxu0 %v296
  %609 = vmatmul.f32.gmra.mxu0 %v567
  %v610 = vpop.f32.mrf.mxu0
  %v611 = vadd.f32 0.0, %v610
  %612 = vdwg.mxu0
  %613 = vmatpush.msra.mxu0 %v357
  %614 = vmatpush.msra.mxu0 %v353
  %615 = vmatpush.msra.mxu0 %v349
  %616 = vmatpush.msra.mxu0 %v345
  %617 = vmatpush.msra.mxu0 %v341
  %618 = vmatpush.msra.mxu0 %v337
  %619 = vmatpush.msra.mxu0 %v333
  %620 = vmatpush.msra.mxu0 %v329
  %621 = vmatpush.msra.mxu0 %v325
  %622 = vmatpush.msra.mxu0 %v321
  %623 = vmatpush.msra.mxu0 %v317
  %624 = vmatpush.msra.mxu0 %v313
  %625 = vmatpush.msra.mxu0 %v309
  %626 = vmatpush.msra.mxu0 %v305
  %627 = vmatpush.msra.mxu0 %v301
  %628 = vmatpush.msra.mxu0 %v297
  %629 = vmatmul.f32.gmra.mxu0 %v567
  %v630 = vpop.f32.mrf.mxu0
  %v631 = vadd.f32 0.0, %v630
  %632 = vdwg.mxu0
  %633 = vmatpush.msra.mxu0 %v358
  %634 = vmatpush.msra.mxu0 %v354
  %635 = vmatpush.msra.mxu0 %v350
  %636 = vmatpush.msra.mxu0 %v346
  %637 = vmatpush.msra.mxu0 %v342
  %638 = vmatpush.msra.mxu0 %v338
  %639 = vmatpush.msra.mxu0 %v334
  %640 = vmatpush.msra.mxu0 %v330
  %641 = vmatpush.msra.mxu0 %v326
  %642 = vmatpush.msra.mxu0 %v322
  %643 = vmatpush.msra.mxu0 %v318
  %644 = vmatpush.msra.mxu0 %v314
  %645 = vmatpush.msra.mxu0 %v310
  %646 = vmatpush.msra.mxu0 %v306
  %647 = vmatpush.msra.mxu0 %v302
  %648 = vmatpush.msra.mxu0 %v298
  %649 = vmatmul.f32.gmra.mxu0 %v567
  %v650 = vpop.f32.mrf.mxu0
  %v651 = vadd.f32 0.0, %v650
  %652 = vdwg.mxu0
  %v653 = vadd.f32 %v569, %v591
  %v654 = vadd.f32 %v570, %v611
  %v655 = vadd.f32 %v571, %v631
  %v656 = vadd.f32 %v572, %v651
  %v657 = vmul.f32 %v653, 0.5
  %v658 = vtanh.pop %v657
  %v659 = vmul.f32 %v658, 0.5
  %v660 = vadd.f32 %v659, 0.5
  %v661 = vmul.f32 %v654, 0.5
  %v662 = vtanh.pop %v661
  %v663 = vmul.f32 %v662, 0.5
  %v664 = vadd.f32 %v663, 0.5
  %v665 = vtanh.pop %v655
  %v666 = vmul.f32 %v656, 0.5
  %v667 = vtanh.pop %v666
  %v668 = vmul.f32 %v667, 0.5
  %v669 = vadd.f32 %v668, 0.5
  %v670 = vmul.f32 %v664, %v565
  %v671 = vmul.f32 %v660, %v665
  %v672 = vadd.f32 %v670, %v671
  %v673 = vtanh.pop %v672
  %v674 = vmul.f32 %v669, %v673
  %s675 = scalar_lea.vmem [#allocation2], 96
  %v676 = vld [vmem:[%s675] sm:$0xff]
  %v677 = vld [vmem:[%s675 + $0x8] sm:$0xff]
  %v678 = vld [vmem:[%s675 + $0x10] sm:$0xff]
  %v679 = vld [vmem:[%s675 + $0x18] sm:$0xff]
  %680 = vmatpush.msra.mxu0 %v355
  %681 = vmatpush.msra.mxu0 %v351
  %682 = vmatpush.msra.mxu0 %v347
  %683 = vmatpush.msra.mxu0 %v343
  %684 = vmatpush.msra.mxu0 %v339
  %685 = vmatpush.msra.mxu0 %v335
  %686 = vmatpush.msra.mxu0 %v331
  %687 = vmatpush.msra.mxu0 %v327
  %688 = vmatpush.msra.mxu0 %v323
  %689 = vmatpush.msra.mxu0 %v319
  %690 = vmatpush.msra.mxu0 %v315
  %691 = vmatpush.msra.mxu0 %v311
  %692 = vmatpush.msra.mxu0 %v307
  %693 = vmatpush.msra.mxu0 %v303
  %694 = vmatpush.msra.mxu0 %v299
  %695 = vmatpush.msra.mxu0 %v295
  %696 = vmatmul.f32.gmra.mxu0 %v674
  %v697 = vpop.f32.mrf.mxu0
  %v698 = vadd.f32 0.0, %v697
  %699 = vdwg.mxu0
  %700 = vmatpush.msra.mxu0 %v356
  %701 = vmatpush.msra.mxu0 %v352
  %702 = vmatpush.msra.mxu0 %v348
  %703 = vmatpush.msra.mxu0 %v344
  %704 = vmatpush.msra.mxu0 %v340
  %705 = vmatpush.msra.mxu0 %v336
  %706 = vmatpush.msra.mxu0 %v332
  %707 = vmatpush.msra.mxu0 %v328
  %708 = vmatpush.msra.mxu0 %v324
  %709 = vmatpush.msra.mxu0 %v320
  %710 = vmatpush.msra.mxu0 %v316
  %711 = vmatpush.msra.mxu0 %v312
  %712 = vmatpush.msra.mxu0 %v308
  %713 = vmatpush.msra.mxu0 %v304
  %714 = vmatpush.msra.mxu0 %v300
  %715 = vmatpush.msra.mxu0 %v296
  %716 = vmatmul.f32.gmra.mxu0 %v674
  %v717 = vpop.f32.mrf.mxu0
  %v718 = vadd.f32 0.0, %v717
  %719 = vdwg.mxu0
  %720 = vmatpush.msra.mxu0 %v357
  %721 = vmatpush.msra.mxu0 %v353
  %722 = vmatpush.msra.mxu0 %v349
  %723 = vmatpush.msra.mxu0 %v345
  %724 = vmatpush.msra.mxu0 %v341
  %725 = vmatpush.msra.mxu0 %v337
  %726 = vmatpush.msra.mxu0 %v333
  %727 = vmatpush.msra.mxu0 %v329
  %728 = vmatpush.msra.mxu0 %v325
  %729 = vmatpush.msra.mxu0 %v321
  %730 = vmatpush.msra.mxu0 %v317
  %731 = vmatpush.msra.mxu0 %v313
  %732 = vmatpush.msra.mxu0 %v309
  %733 = vmatpush.msra.mxu0 %v305
  %734 = vmatpush.msra.mxu0 %v301
  %735 = vmatpush.msra.mxu0 %v297
  %736 = vmatmul.f32.gmra.mxu0 %v674
  %v737 = vpop.f32.mrf.mxu0
  %v738 = vadd.f32 0.0, %v737
  %739 = vdwg.mxu0
  %740 = vmatpush.msra.mxu0 %v358
  %741 = vmatpush.msra.mxu0 %v354
  %742 = vmatpush.msra.mxu0 %v350
  %743 = vmatpush.msra.mxu0 %v346
  %744 = vmatpush.msra.mxu0 %v342
  %745 = vmatpush.msra.mxu0 %v338
  %746 = vmatpush.msra.mxu0 %v334
  %747 = vmatpush.msra.mxu0 %v330
  %748 = vmatpush.msra.mxu0 %v326
  %749 = vmatpush.msra.mxu0 %v322
  %750 = vmatpush.msra.mxu0 %v318
  %751 = vmatpush.msra.mxu0 %v314
  %752 = vmatpush.msra.mxu0 %v310
  %753 = vmatpush.msra.mxu0 %v306
  %754 = vmatpush.msra.mxu0 %v302
  %755 = vmatpush.msra.mxu0 %v298
  %756 = vmatmul.f32.gmra.mxu0 %v674
  %v757 = vpop.f32.mrf.mxu0
  %v758 = vadd.f32 0.0, %v757
  %759 = vdwg.mxu0
  %v760 = vadd.f32 %v676, %v698
  %v761 = vadd.f32 %v677, %v718
  %v762 = vadd.f32 %v678, %v738
  %v763 = vadd.f32 %v679, %v758
  %v764 = vmul.f32 %v760, 0.5
  %v765 = vtanh.pop %v764
  %v766 = vmul.f32 %v765, 0.5
  %v767 = vadd.f32 %v766, 0.5
  %v768 = vmul.f32 %v761, 0.5
  %v769 = vtanh.pop %v768
  %v770 = vmul.f32 %v769, 0.5
  %v771 = vadd.f32 %v770, 0.5
  %v772 = vtanh.pop %v762
  %v773 = vmul.f32 %v763, 0.5
  %v774 = vtanh.pop %v773
  %v775 = vmul.f32 %v774, 0.5
  %v776 = vadd.f32 %v775, 0.5
  %v777 = vmul.f32 %v771, %v672
  %v778 = vmul.f32 %v767, %v772
  %v779 = vadd.f32 %v777, %v778
  %v780 = vtanh.pop %v779
  %v781 = vmul.f32 %v776, %v780
  %s782 = scalar_lea.vmem [#allocation2], 128
  %v783 = vld [vmem:[%s782] sm:$0xff]
  %v784 = vld [vmem:[%s782 + $0x8] sm:$0xff]
  %v785 = vld [vmem:[%s782 + $0x10] sm:$0xff]
  %v786 = vld [vmem:[%s782 + $0x18] sm:$0xff]
  %787 = vmatpush.msra.mxu0 %v355
  %788 = vmatpush.msra.mxu0 %v351
  %789 = vmatpush.msra.mxu0 %v347
  %790 = vmatpush.msra.mxu0 %v343
  %791 = vmatpush.msra.mxu0 %v339
  %792 = vmatpush.msra.mxu0 %v335
  %793 = vmatpush.msra.mxu0 %v331
  %794 = vmatpush.msra.mxu0 %v327
  %795 = vmatpush.msra.mxu0 %v323
  %796 = vmatpush.msra.mxu0 %v319
  %797 = vmatpush.msra.mxu0 %v315
  %798 = vmatpush.msra.mxu0 %v311
  %799 = vmatpush.msra.mxu0 %v307
  %800 = vmatpush.msra.mxu0 %v303
  %801 = vmatpush.msra.mxu0 %v299
  %802 = vmatpush.msra.mxu0 %v295
  %803 = vmatmul.f32.gmra.mxu0 %v781
  %v804 = vpop.f32.mrf.mxu0
  %v805 = vadd.f32 0.0, %v804
  %806 = vdwg.mxu0
  %807 = vmatpush.msra.mxu0 %v356
  %808 = vmatpush.msra.mxu0 %v352
  %809 = vmatpush.msra.mxu0 %v348
  %810 = vmatpush.msra.mxu0 %v344
  %811 = vmatpush.msra.mxu0 %v340
  %812 = vmatpush.msra.mxu0 %v336
  %813 = vmatpush.msra.mxu0 %v332
  %814 = vmatpush.msra.mxu0 %v328
  %815 = vmatpush.msra.mxu0 %v324
  %816 = vmatpush.msra.mxu0 %v320
  %817 = vmatpush.msra.mxu0 %v316
  %818 = vmatpush.msra.mxu0 %v312
  %819 = vmatpush.msra.mxu0 %v308
  %820 = vmatpush.msra.mxu0 %v304
  %821 = vmatpush.msra.mxu0 %v300
  %822 = vmatpush.msra.mxu0 %v296
  %823 = vmatmul.f32.gmra.mxu0 %v781
  %v824 = vpop.f32.mrf.mxu0
  %v825 = vadd.f32 0.0, %v824
  %826 = vdwg.mxu0
  %827 = vmatpush.msra.mxu0 %v357
  %828 = vmatpush.msra.mxu0 %v353
  %829 = vmatpush.msra.mxu0 %v349
  %830 = vmatpush.msra.mxu0 %v345
  %831 = vmatpush.msra.mxu0 %v341
  %832 = vmatpush.msra.mxu0 %v337
  %833 = vmatpush.msra.mxu0 %v333
  %834 = vmatpush.msra.mxu0 %v329
  %835 = vmatpush.msra.mxu0 %v325
  %836 = vmatpush.msra.mxu0 %v321
  %837 = vmatpush.msra.mxu0 %v317
  %838 = vmatpush.msra.mxu0 %v313
  %839 = vmatpush.msra.mxu0 %v309
  %840 = vmatpush.msra.mxu0 %v305
  %841 = vmatpush.msra.mxu0 %v301
  %842 = vmatpush.msra.mxu0 %v297
  %843 = vmatmul.f32.gmra.mxu0 %v781
  %v844 = vpop.f32.mrf.mxu0
  %v845 = vadd.f32 0.0, %v844
  %846 = vdwg.mxu0
  %847 = vmatpush.msra.mxu0 %v358
  %848 = vmatpush.msra.mxu0 %v354
  %849 = vmatpush.msra.mxu0 %v350
  %850 = vmatpush.msra.mxu0 %v346
  %851 = vmatpush.msra.mxu0 %v342
  %852 = vmatpush.msra.mxu0 %v338
  %853 = vmatpush.msra.mxu0 %v334
  %854 = vmatpush.msra.mxu0 %v330
  %855 = vmatpush.msra.mxu0 %v326
  %856 = vmatpush.msra.mxu0 %v322
  %857 = vmatpush.msra.mxu0 %v318
  %858 = vmatpush.msra.mxu0 %v314
  %859 = vmatpush.msra.mxu0 %v310
  %860 = vmatpush.msra.mxu0 %v306
  %861 = vmatpush.msra.mxu0 %v302
  %862 = vmatpush.msra.mxu0 %v298
  %863 = vmatmul.f32.gmra.mxu0 %v781
  %v864 = vpop.f32.mrf.mxu0
  %v865 = vadd.f32 0.0, %v864
  %866 = vdwg.mxu0
  %v867 = vadd.f32 %v783, %v805
  %v868 = vadd.f32 %v784, %v825
  %v869 = vadd.f32 %v785, %v845
  %v870 = vadd.f32 %v786, %v865
  %v871 = vmul.f32 %v867, 0.5
  %v872 = vtanh.pop %v871
  %v873 = vmul.f32 %v872, 0.5
  %v874 = vadd.f32 %v873, 0.5
  %v875 = vmul.f32 %v868, 0.5
  %v876 = vtanh.pop %v875
  %v877 = vmul.f32 %v876, 0.5
  %v878 = vadd.f32 %v877, 0.5
  %v879 = vtanh.pop %v869
  %v880 = vmul.f32 %v870, 0.5
  %v881 = vtanh.pop %v880
  %v882 = vmul.f32 %v881, 0.5
  %v883 = vadd.f32 %v882, 0.5
  %v884 = vmul.f32 %v878, %v779
  %v885 = vmul.f32 %v874, %v879
  %v886 = vadd.f32 %v884, %v885
  %v887 = vtanh.pop %v886
  %v888 = vmul.f32 %v883, %v887
  %s889 = scalar_lea.vmem [#allocation2], 160
  %v890 = vld [vmem:[%s889] sm:$0xff]
  %v891 = vld [vmem:[%s889 + $0x8] sm:$0xff]
  %v892 = vld [vmem:[%s889 + $0x10] sm:$0xff]
  %v893 = vld [vmem:[%s889 + $0x18] sm:$0xff]
  %894 = vmatpush.msra.mxu0 %v355
  %895 = vmatpush.msra.mxu0 %v351
  %896 = vmatpush.msra.mxu0 %v347
  %897 = vmatpush.msra.mxu0 %v343
  %898 = vmatpush.msra.mxu0 %v339
  %899 = vmatpush.msra.mxu0 %v335
  %900 = vmatpush.msra.mxu0 %v331
  %901 = vmatpush.msra.mxu0 %v327
  %902 = vmatpush.msra.mxu0 %v323
  %903 = vmatpush.msra.mxu0 %v319
  %904 = vmatpush.msra.mxu0 %v315
  %905 = vmatpush.msra.mxu0 %v311
  %906 = vmatpush.msra.mxu0 %v307
  %907 = vmatpush.msra.mxu0 %v303
  %908 = vmatpush.msra.mxu0 %v299
  %909 = vmatpush.msra.mxu0 %v295
  %910 = vmatmul.f32.gmra.mxu0 %v888
  %v911 = vpop.f32.mrf.mxu0
  %v912 = vadd.f32 0.0, %v911
  %913 = vdwg.mxu0
  %914 = vmatpush.msra.mxu0 %v356
  %915 = vmatpush.msra.mxu0 %v352
  %916 = vmatpush.msra.mxu0 %v348
  %917 = vmatpush.msra.mxu0 %v344
  %918 = vmatpush.msra.mxu0 %v340
  %919 = vmatpush.msra.mxu0 %v336
  %920 = vmatpush.msra.mxu0 %v332
  %921 = vmatpush.msra.mxu0 %v328
  %922 = vmatpush.msra.mxu0 %v324
  %923 = vmatpush.msra.mxu0 %v320
  %924 = vmatpush.msra.mxu0 %v316
  %925 = vmatpush.msra.mxu0 %v312
  %926 = vmatpush.msra.mxu0 %v308
  %927 = vmatpush.msra.mxu0 %v304
  %928 = vmatpush.msra.mxu0 %v300
  %929 = vmatpush.msra.mxu0 %v296
  %930 = vmatmul.f32.gmra.mxu0 %v888
  %v931 = vpop.f32.mrf.mxu0
  %v932 = vadd.f32 0.0, %v931
  %933 = vdwg.mxu0
  %934 = vmatpush.msra.mxu0 %v357
  %935 = vmatpush.msra.mxu0 %v353
  %936 = vmatpush.msra.mxu0 %v349
  %937 = vmatpush.msra.mxu0 %v345
  %938 = vmatpush.msra.mxu0 %v341
  %939 = vmatpush.msra.mxu0 %v337
  %940 = vmatpush.msra.mxu0 %v333
  %941 = vmatpush.msra.mxu0 %v329
  %942 = vmatpush.msra.mxu0 %v325
  %943 = vmatpush.msra.mxu0 %v321
  %944 = vmatpush.msra.mxu0 %v317
  %945 = vmatpush.msra.mxu0 %v313
  %946 = vmatpush.msra.mxu0 %v309
  %947 = vmatpush.msra.mxu0 %v305
  %948 = vmatpush.msra.mxu0 %v301
  %949 = vmatpush.msra.mxu0 %v297
  %950 = vmatmul.f32.gmra.mxu0 %v888
  %v951 = vpop.f32.mrf.mxu0
  %v952 = vadd.f32 0.0, %v951
  %953 = vdwg.mxu0
  %954 = vmatpush.msra.mxu0 %v358
  %955 = vmatpush.msra.mxu0 %v354
  %956 = vmatpush.msra.mxu0 %v350
  %957 = vmatpush.msra.mxu0 %v346
  %958 = vmatpush.msra.mxu0 %v342
  %959 = vmatpush.msra.mxu0 %v338
  %960 = vmatpush.msra.mxu0 %v334
  %961 = vmatpush.msra.mxu0 %v330
  %962 = vmatpush.msra.mxu0 %v326
  %963 = vmatpush.msra.mxu0 %v322
  %964 = vmatpush.msra.mxu0 %v318
  %965 = vmatpush.msra.mxu0 %v314
  %966 = vmatpush.msra.mxu0 %v310
  %967 = vmatpush.msra.mxu0 %v306
  %968 = vmatpush.msra.mxu0 %v302
  %969 = vmatpush.msra.mxu0 %v298
  %970 = vmatmul.f32.gmra.mxu0 %v888
  %v971 = vpop.f32.mrf.mxu0
  %v972 = vadd.f32 0.0, %v971
  %973 = vdwg.mxu0
  %v974 = vadd.f32 %v890, %v912
  %v975 = vadd.f32 %v891, %v932
  %v976 = vadd.f32 %v892, %v952
  %v977 = vadd.f32 %v893, %v972
  %v978 = vmul.f32 %v974, 0.5
  %v979 = vtanh.pop %v978
  %v980 = vmul.f32 %v979, 0.5
  %v981 = vadd.f32 %v980, 0.5
  %v982 = vmul.f32 %v975, 0.5
  %v983 = vtanh.pop %v982
  %v984 = vmul.f32 %v983, 0.5
  %v985 = vadd.f32 %v984, 0.5
  %v986 = vtanh.pop %v976
  %v987 = vmul.f32 %v977, 0.5
  %v988 = vtanh.pop %v987
  %v989 = vmul.f32 %v988, 0.5
  %v990 = vadd.f32 %v989, 0.5
  %v991 = vmul.f32 %v985, %v886
  %v992 = vmul.f32 %v981, %v986
  %v993 = vadd.f32 %v991, %v992
  %v994 = vtanh.pop %v993
  %v995 = vmul.f32 %v990, %v994
  %s996 = scalar_lea.vmem [#allocation2], 192
  %v997 = vld [vmem:[%s996] sm:$0xff]
  %v998 = vld [vmem:[%s996 + $0x8] sm:$0xff]
  %v999 = vld [vmem:[%s996 + $0x10] sm:$0xff]
  %v1000 = vld [vmem:[%s996 + $0x18] sm:$0xff]
  %1001 = vmatpush.msra.mxu0 %v355
  %1002 = vmatpush.msra.mxu0 %v351
  %1003 = vmatpush.msra.mxu0 %v347
  %1004 = vmatpush.msra.mxu0 %v343
  %1005 = vmatpush.msra.mxu0 %v339
  %1006 = vmatpush.msra.mxu0 %v335
  %1007 = vmatpush.msra.mxu0 %v331
  %1008 = vmatpush.msra.mxu0 %v327
  %1009 = vmatpush.msra.mxu0 %v323
  %1010 = vmatpush.msra.mxu0 %v319
  %1011 = vmatpush.msra.mxu0 %v315
  %1012 = vmatpush.msra.mxu0 %v311
  %1013 = vmatpush.msra.mxu0 %v307
  %1014 = vmatpush.msra.mxu0 %v303
  %1015 = vmatpush.msra.mxu0 %v299
  %1016 = vmatpush.msra.mxu0 %v295
  %1017 = vmatmul.f32.gmra.mxu0 %v995
  %v1018 = vpop.f32.mrf.mxu0
  %v1019 = vadd.f32 0.0, %v1018
  %1020 = vdwg.mxu0
  %1021 = vmatpush.msra.mxu0 %v356
  %1022 = vmatpush.msra.mxu0 %v352
  %1023 = vmatpush.msra.mxu0 %v348
  %1024 = vmatpush.msra.mxu0 %v344
  %1025 = vmatpush.msra.mxu0 %v340
  %1026 = vmatpush.msra.mxu0 %v336
  %1027 = vmatpush.msra.mxu0 %v332
  %1028 = vmatpush.msra.mxu0 %v328
  %1029 = vmatpush.msra.mxu0 %v324
  %1030 = vmatpush.msra.mxu0 %v320
  %1031 = vmatpush.msra.mxu0 %v316
  %1032 = vmatpush.msra.mxu0 %v312
  %1033 = vmatpush.msra.mxu0 %v308
  %1034 = vmatpush.msra.mxu0 %v304
  %1035 = vmatpush.msra.mxu0 %v300
  %1036 = vmatpush.msra.mxu0 %v296
  %1037 = vmatmul.f32.gmra.mxu0 %v995
  %v1038 = vpop.f32.mrf.mxu0
  %v1039 = vadd.f32 0.0, %v1038
  %1040 = vdwg.mxu0
  %1041 = vmatpush.msra.mxu0 %v357
  %1042 = vmatpush.msra.mxu0 %v353
  %1043 = vmatpush.msra.mxu0 %v349
  %1044 = vmatpush.msra.mxu0 %v345
  %1045 = vmatpush.msra.mxu0 %v341
  %1046 = vmatpush.msra.mxu0 %v337
  %1047 = vmatpush.msra.mxu0 %v333
  %1048 = vmatpush.msra.mxu0 %v329
  %1049 = vmatpush.msra.mxu0 %v325
  %1050 = vmatpush.msra.mxu0 %v321
  %1051 = vmatpush.msra.mxu0 %v317
  %1052 = vmatpush.msra.mxu0 %v313
  %1053 = vmatpush.msra.mxu0 %v309
  %1054 = vmatpush.msra.mxu0 %v305
  %1055 = vmatpush.msra.mxu0 %v301
  %1056 = vmatpush.msra.mxu0 %v297
  %1057 = vmatmul.f32.gmra.mxu0 %v995
  %v1058 = vpop.f32.mrf.mxu0
  %v1059 = vadd.f32 0.0, %v1058
  %1060 = vdwg.mxu0
  %1061 = vmatpush.msra.mxu0 %v358
  %1062 = vmatpush.msra.mxu0 %v354
  %1063 = vmatpush.msra.mxu0 %v350
  %1064 = vmatpush.msra.mxu0 %v346
  %1065 = vmatpush.msra.mxu0 %v342
  %1066 = vmatpush.msra.mxu0 %v338
  %1067 = vmatpush.msra.mxu0 %v334
  %1068 = vmatpush.msra.mxu0 %v330
  %1069 = vmatpush.msra.mxu0 %v326
  %1070 = vmatpush.msra.mxu0 %v322
  %1071 = vmatpush.msra.mxu0 %v318
  %1072 = vmatpush.msra.mxu0 %v314
  %1073 = vmatpush.msra.mxu0 %v310
  %1074 = vmatpush.msra.mxu0 %v306
  %1075 = vmatpush.msra.mxu0 %v302
  %1076 = vmatpush.msra.mxu0 %v298
  %1077 = vmatmul.f32.gmra.mxu0 %v995
  %v1078 = vpop.f32.mrf.mxu0
  %v1079 = vadd.f32 0.0, %v1078
  %1080 = vdwg.mxu0
  %v1081 = vadd.f32 %v997, %v1019
  %v1082 = vadd.f32 %v998, %v1039
  %v1083 = vadd.f32 %v999, %v1059
  %v1084 = vadd.f32 %v1000, %v1079
  %v1085 = vmul.f32 %v1081, 0.5
  %v1086 = vtanh.pop %v1085
  %v1087 = vmul.f32 %v1086, 0.5
  %v1088 = vadd.f32 %v1087, 0.5
  %v1089 = vmul.f32 %v1082, 0.5
  %v1090 = vtanh.pop %v1089
  %v1091 = vmul.f32 %v1090, 0.5
  %v1092 = vadd.f32 %v1091, 0.5
  %v1093 = vtanh.pop %v1083
  %v1094 = vmul.f32 %v1084, 0.5
  %v1095 = vtanh.pop %v1094
  %v1096 = vmul.f32 %v1095, 0.5
  %v1097 = vadd.f32 %v1096, 0.5
  %v1098 = vmul.f32 %v1092, %v993
  %v1099 = vmul.f32 %v1088, %v1093
  %v1100 = vadd.f32 %v1098, %v1099
  %v1101 = vtanh.pop %v1100
  %v1102 = vmul.f32 %v1097, %v1101
  %s1103 = scalar_lea.vmem [#allocation2], 224
  %v1104 = vld [vmem:[%s1103] sm:$0xff]
  %v1105 = vld [vmem:[%s1103 + $0x8] sm:$0xff]
  %v1106 = vld [vmem:[%s1103 + $0x10] sm:$0xff]
  %v1107 = vld [vmem:[%s1103 + $0x18] sm:$0xff]
  %1108 = vmatpush.msra.mxu0 %v355
  %1109 = vmatpush.msra.mxu0 %v351
  %1110 = vmatpush.msra.mxu0 %v347
  %1111 = vmatpush.msra.mxu0 %v343
  %1112 = vmatpush.msra.mxu0 %v339
  %1113 = vmatpush.msra.mxu0 %v335
  %1114 = vmatpush.msra.mxu0 %v331
  %1115 = vmatpush.msra.mxu0 %v327
  %1116 = vmatpush.msra.mxu0 %v323
  %1117 = vmatpush.msra.mxu0 %v319
  %1118 = vmatpush.msra.mxu0 %v315
  %1119 = vmatpush.msra.mxu0 %v311
  %1120 = vmatpush.msra.mxu0 %v307
  %1121 = vmatpush.msra.mxu0 %v303
  %1122 = vmatpush.msra.mxu0 %v299
  %1123 = vmatpush.msra.mxu0 %v295
  %1124 = vmatmul.f32.gmra.mxu0 %v1102
  %v1125 = vpop.f32.mrf.mxu0
  %v1126 = vadd.f32 0.0, %v1125
  %1127 = vdwg.mxu0
  %1128 = vmatpush.msra.mxu0 %v356
  %1129 = vmatpush.msra.mxu0 %v352
  %1130 = vmatpush.msra.mxu0 %v348
  %1131 = vmatpush.msra.mxu0 %v344
  %1132 = vmatpush.msra.mxu0 %v340
  %1133 = vmatpush.msra.mxu0 %v336
  %1134 = vmatpush.msra.mxu0 %v332
  %1135 = vmatpush.msra.mxu0 %v328
  %1136 = vmatpush.msra.mxu0 %v324
  %1137 = vmatpush.msra.mxu0 %v320
  %1138 = vmatpush.msra.mxu0 %v316
  %1139 = vmatpush.msra.mxu0 %v312
  %1140 = vmatpush.msra.mxu0 %v308
  %1141 = vmatpush.msra.mxu0 %v304
  %1142 = vmatpush.msra.mxu0 %v300
  %1143 = vmatpush.msra.mxu0 %v296
  %1144 = vmatmul.f32.gmra.mxu0 %v1102
  %v1145 = vpop.f32.mrf.mxu0
  %v1146 = vadd.f32 0.0, %v1145
  %1147 = vdwg.mxu0
  %1148 = vmatpush.msra.mxu0 %v357
  %1149 = vmatpush.msra.mxu0 %v353
  %1150 = vmatpush.msra.mxu0 %v349
  %1151 = vmatpush.msra.mxu0 %v345
  %1152 = vmatpush.msra.mxu0 %v341
  %1153 = vmatpush.msra.mxu0 %v337
  %1154 = vmatpush.msra.mxu0 %v333
  %1155 = vmatpush.msra.mxu0 %v329
  %1156 = vmatpush.msra.mxu0 %v325
  %1157 = vmatpush.msra.mxu0 %v321
  %1158 = vmatpush.msra.mxu0 %v317
  %1159 = vmatpush.msra.mxu0 %v313
  %1160 = vmatpush.msra.mxu0 %v309
  %1161 = vmatpush.msra.mxu0 %v305
  %1162 = vmatpush.msra.mxu0 %v301
  %1163 = vmatpush.msra.mxu0 %v297
  %1164 = vmatmul.f32.gmra.mxu0 %v1102
  %v1165 = vpop.f32.mrf.mxu0
  %v1166 = vadd.f32 0.0, %v1165
  %1167 = vdwg.mxu0
  %1168 = vmatpush.msra.mxu0 %v358
  %1169 = vmatpush.msra.mxu0 %v354
  %1170 = vmatpush.msra.mxu0 %v350
  %1171 = vmatpush.msra.mxu0 %v346
  %1172 = vmatpush.msra.mxu0 %v342
  %1173 = vmatpush.msra.mxu0 %v338
  %1174 = vmatpush.msra.mxu0 %v334
  %1175 = vmatpush.msra.mxu0 %v330
  %1176 = vmatpush.msra.mxu0 %v326
  %1177 = vmatpush.msra.mxu0 %v322
  %1178 = vmatpush.msra.mxu0 %v318
  %1179 = vmatpush.msra.mxu0 %v314
  %1180 = vmatpush.msra.mxu0 %v310
  %1181 = vmatpush.msra.mxu0 %v306
  %1182 = vmatpush.msra.mxu0 %v302
  %1183 = vmatpush.msra.mxu0 %v298
  %1184 = vmatmul.f32.gmra.mxu0 %v1102
  %v1185 = vpop.f32.mrf.mxu0
  %v1186 = vadd.f32 0.0, %v1185
  %1187 = vdwg.mxu0
  %v1188 = vadd.f32 %v1104, %v1126
  %v1189 = vadd.f32 %v1105, %v1146
  %v1190 = vadd.f32 %v1106, %v1166
  %v1191 = vadd.f32 %v1107, %v1186
  %v1192 = vmul.f32 %v1188, 0.5
  %v1193 = vtanh.pop %v1192
  %v1194 = vmul.f32 %v1193, 0.5
  %v1195 = vadd.f32 %v1194, 0.5
  %v1196 = vmul.f32 %v1189, 0.5
  %v1197 = vtanh.pop %v1196
  %v1198 = vmul.f32 %v1197, 0.5
  %v1199 = vadd.f32 %v1198, 0.5
  %v1200 = vtanh.pop %v1190
  %v1201 = vmul.f32 %v1191, 0.5
  %v1202 = vtanh.pop %v1201
  %v1203 = vmul.f32 %v1202, 0.5
  %v1204 = vadd.f32 %v1203, 0.5
  %v1205 = vmul.f32 %v1199, %v1100
  %v1206 = vmul.f32 %v1195, %v1200
  %v1207 = vadd.f32 %v1205, %v1206
  %v1208 = vtanh.pop %v1207
  %v1209 = vmul.f32 %v1204, %v1208
  %v1210 = vld [vmem:[%s4] sm:$0xff]
  %v1211 = vld [vmem:[%s4 + $0x8] sm:$0xff]
  %v1212 = vld [vmem:[%s4 + $0x10] sm:$0xff]
  %v1213 = vld [vmem:[%s4 + $0x18] sm:$0xff]
  %v1214 = vld [vmem:[%s4 + $0x20] sm:$0xff]
  %v1215 = vld [vmem:[%s4 + $0x28] sm:$0xff]
  %v1216 = vld [vmem:[%s4 + $0x30] sm:$0xff]
  %v1217 = vld [vmem:[%s4 + $0x38] sm:$0xff]
  %v1218 = vld [vmem:[%s4 + $0x40] sm:$0xff]
  %v1219 = vld [vmem:[%s4 + $0x48] sm:$0xff]
  %v1220 = vld [vmem:[%s4 + $0x50] sm:$0xff]
  %v1221 = vld [vmem:[%s4 + $0x58] sm:$0xff]
  %v1222 = vld [vmem:[%s4 + $0x60] sm:$0xff]
  %v1223 = vld [vmem:[%s4 + $0x68] sm:$0xff]
  %v1224 = vld [vmem:[%s4 + $0x70] sm:$0xff]
  %v1225 = vld [vmem:[%s4 + $0x78] sm:$0xff]
  %v1226 = vld [vmem:[%s5] sm:$0x1]
  %v1228 = vperm.slane %v1226, 0
  %1230 = vmatpush.msra.mxu0 %v1225
  %1231 = vmatpush.msra.mxu0 %v1224
  %1232 = vmatpush.msra.mxu0 %v1223
  %1233 = vmatpush.msra.mxu0 %v1222
  %1234 = vmatpush.msra.mxu0 %v1221
  %1235 = vmatpush.msra.mxu0 %v1220
  %1236 = vmatpush.msra.mxu0 %v1219
  %1237 = vmatpush.msra.mxu0 %v1218
  %1238 = vmatpush.msra.mxu0 %v1217
  %1239 = vmatpush.msra.mxu0 %v1216
  %1240 = vmatpush.msra.mxu0 %v1215
  %1241 = vmatpush.msra.mxu0 %v1214
  %1242 = vmatpush.msra.mxu0 %v1213
  %1243 = vmatpush.msra.mxu0 %v1212
  %1244 = vmatpush.msra.mxu0 %v1211
  %1245 = vmatpush.msra.mxu0 %v1210
  %1246 = vmatmul.f32.gmra.mxu0 %v1209
  %v1247 = vpop.f32.mrf.mxu0
  %v1248 = vadd.f32 %v1228, %v1247
  %1249 = vdwg.mxu0
  %1250 = vst [vmem:[%s6] sm:$0xff] %v1248
  // Predicated region
  $region26: #{lstm_net_forward.1} parent=0 // pred_check
    _
  $region27: #{lstm_net_forward.1} parent=0 // pred_check_branch
    %1252 = sbr.rel (0) target = $region29
  $region28: #{lstm_net_forward.1} parent=0 // pred_region
    _
  $region29: #{lstm_net_forward.1} parent=0 // pred_fallthru
    _
  // Predicated region
  $region30: #{lstm_net_forward.1} parent=0 // pred_check
    _
  $region31: #{lstm_net_forward.1} parent=0 // pred_check_branch
    %1254 = sbr.rel (0) target = $region33
  $region32: #{lstm_net_forward.1} parent=0 // pred_region
    _
  $region33: #{lstm_net_forward.1} parent=0 // pred_fallthru
    _

</llo_original>
